<compile_context>
chip_gen: v5e
topology: v5e:2x2
jax: 0.10.0
libtpu: 0.0.40
codegen_flags: <defaults>
</compile_context>

<pallas_src>
import functools
import math

import numpy as np
import jax
import jax.numpy as jnp
from jax import lax
from jax.experimental import pallas as pl
from jax.experimental.pallas import tpu as pltpu


# ----------------------------------------------------------------------------
# Fused GBlock kernel (one grid step == one image, channel-major (C, P) tiles)
# ----------------------------------------------------------------------------
def _gblock_kernel(x_ref, dlat_ref, swT_ref, sbT_ref, upT_ref, tmask_ref,
                   n1_ref, n2_ref, nw_ref, cwT_ref, cb_ref, o_ref, *, C, W2):
    P = o_ref.shape[-1]
    inv_p = 1.0 / P

    # Both ApplyStyle FCs for this image in one small MXU op.  Channels land on
    # the SUBLANE axis, so scale/bias broadcast along lanes with no transpose.
    styles = jnp.dot(swT_ref[...], dlat_ref[...],
                     preferred_element_type=jnp.float32) + sbT_ref[...]
    styles = jnp.where(styles >= 0, styles, 0.2 * styles)        # (4C, 1)

    nw = nw_ref[...]                                             # (C, 2)

    def epilogue(v, noise_row, nw_col, scale_col, bias_col):
        # ApplyNoise + LeakyReLU(0.2) + InstanceNorm(eps=1e-8, centered)
        # + ApplyStyle, all on one lane-dense (C, P) tile.
        v = v + nw_col * noise_row
        v = jnp.where(v >= 0, v, 0.2 * v)
        mean = jnp.sum(v, axis=1, keepdims=True) * inv_p
        c = v - mean
        var = jnp.sum(c * c, axis=1, keepdims=True) * inv_p
        c = c * lax.rsqrt(var + 1e-8)
        return c * (scale_col + 1.0) + bias_col

    # Upscale2d(factor=2, gain=1): nearest x2 as a 0/1 MXU matmul with a
    # lane-dense (C, P) result.
    xu = jnp.dot(x_ref[...], upT_ref[...], preferred_element_type=jnp.float32)

    # adaIn1
    x1 = epilogue(xu, n1_ref[...], nw[:, 0:1],
                  styles[0:C, :], styles[C:2 * C, :])

    # conv1: 3x3 'same' conv as ONE im2col matmul (K = 9*C).  Taps are static
    # lane rolls (XLU) of x1; border wrap is removed with precomputed 0/1
    # lane-dense masks; taps stack along sublanes in 32-row chunks.
    taps = []
    t = 0
    for dy in range(3):
        for dx in range(3):
            off = (dy - 1) * W2 + (dx - 1)
            if off == 0:
                tap = x1
            else:
                tap = pltpu.roll(x1, shift=(-off) % P, axis=1)
                tap = tap * tmask_ref[t:t + 1, :]
            taps.append(tap)
            t += 1
    patches = jnp.concatenate(taps, axis=0)                      # (9C, P)
    y = jnp.dot(cwT_ref[...], patches,
                preferred_element_type=jnp.float32) + cb_ref[...]

    # adaIn2 -> lane-dense (C, P) output store
    o_ref[...] = epilogue(y, n2_ref[...], nw[:, 1:2],
                          styles[2 * C:3 * C, :], styles[3 * C:4 * C, :])


# ----------------------------------------------------------------------------
# Host-side shape-only constants (cached so they are not rebuilt per call)
# ----------------------------------------------------------------------------
@functools.lru_cache(maxsize=None)
def _spatial_constants(H, W):
    H2, W2 = 2 * H, 2 * W
    P, HW = H2 * W2, H * W
    p = np.arange(P)
    py, px = p // W2, p % W2
    # nearest x2 upscale operator (channel-major form): upT[hw, p] = 1 iff
    # source pixel of p is hw.
    src = (py // 2) * W + (px // 2)
    upT = (np.arange(HW)[:, None] == src[None, :]).astype(np.float32)   # (HW, P)
    # per-tap validity masks for the 3x3 'same' conv (kills roll wrap-around).
    masks = []
    for dy in range(3):
        for dx in range(3):
            sy, sx = py + dy - 1, px + dx - 1
            masks.append(((sy >= 0) & (sy < H2) & (sx >= 0) & (sx < W2))
                         .astype(np.float32))
    tmask = np.stack(masks, axis=0)                                      # (9, P)
    return jnp.asarray(upT), jnp.asarray(tmask)


# ----------------------------------------------------------------------------
# Wrapper: prepare layouts, single pallas_call (grid parallel over batch)
# ----------------------------------------------------------------------------
def gblock_forward(params, x, dlatent, noise_input, res):
    # x: (B, C, H, W) NCHW (matches the PyTorch module)
    # dlatent: (B, L, Dlat); noise_input[i]: (B, 1, 2H, 2W)
    B, C, H, W = x.shape
    H2, W2 = 2 * H, 2 * W
    P, HW = H2 * W2, H * W
    Dlat = dlatent.shape[-1]

    upT, tmask = _spatial_constants(H, W)

    # Block-diagonal fused style weight: no wasted cross-term columns; channels
    # on sublanes because the kernel consumes styles as (4C, 1) columns.
    sw1, sw2 = params["style1_w_eff"], params["style2_w_eff"]    # (Dlat, 2C)
    swT = jnp.zeros((4 * C, 2 * Dlat), jnp.float32)
    swT = swT.at[0:2 * C, 0:Dlat].set(sw1.T)
    swT = swT.at[2 * C:4 * C, Dlat:2 * Dlat].set(sw2.T)
    sbT = jnp.concatenate([params["style1_b_eff"],
                           params["style2_b_eff"]]).reshape(4 * C, 1)

    dlat_col = jnp.concatenate(
        [dlatent[:, res * 2 - 4], dlatent[:, res * 2 - 3]],
        axis=1).reshape(B, 2 * Dlat, 1)                          # (B, 2Dlat, 1)

    n1 = noise_input[res * 2 - 4].reshape(B, 1, P)
    n2 = noise_input[res * 2 - 3].reshape(B, 1, P)
    nw = jnp.stack([params["noise1_w"], params["noise2_w"]], axis=1)   # (C, 2)

    # conv weight (Co, Ci, 3, 3) OIHW -> (Co, 9*Ci) in kernel tap order.
    cwT = jnp.transpose(params["conv1_w_eff"], (0, 2, 3, 1)).reshape(C, 9 * C)
    cb = params["conv1_b_eff"].reshape(C, 1)

    x_flat = x.reshape(B, C, HW)

    kernel = functools.partial(_gblock_kernel, C=C, W2=W2)
    out = pl.pallas_call(
        kernel,
        out_shape=jax.ShapeDtypeStruct((B, C, P), jnp.float32),
        grid=(B,),
        in_specs=[
            pl.BlockSpec((None, C, HW), lambda b: (b, 0, 0)),         # x
            pl.BlockSpec((None, 2 * Dlat, 1), lambda b: (b, 0, 0)),   # dlat col
            pl.BlockSpec((4 * C, 2 * Dlat), lambda b: (0, 0)),        # swT (bdiag)
            pl.BlockSpec((4 * C, 1), lambda b: (0, 0)),               # sbT
            pl.BlockSpec((HW, P), lambda b: (0, 0)),                  # upT
            pl.BlockSpec((9, P), lambda b: (0, 0)),                   # tap masks
            pl.BlockSpec((None, 1, P), lambda b: (b, 0, 0)),          # noise1
            pl.BlockSpec((None, 1, P), lambda b: (b, 0, 0)),          # noise2
            pl.BlockSpec((C, 2), lambda b: (0, 0)),                   # noise w
            pl.BlockSpec((C, 9 * C), lambda b: (0, 0)),               # conv w
            pl.BlockSpec((C, 1), lambda b: (0, 0)),                   # conv b
        ],
        out_specs=pl.BlockSpec((None, C, P), lambda b: (b, 0, 0)),
        compiler_params=pltpu.CompilerParams(
            dimension_semantics=("parallel",)),
    )(x_flat, dlat_col, swT, sbT, upT, tmask, n1, n2, nw, cwT, cb)
    return out.reshape(B, C, H2, W2)


# ----------------------------------------------------------------------------
# Pure-JAX reference (NCHW, same as the PyTorch module) for verification
# ----------------------------------------------------------------------------
def reference_forward(params, x, dlatent, noise_input, res):
    def fc_ref(d, w, b):
        y = d @ w + b
        return jnp.where(y >= 0, y, 0.2 * y)

    def epi_ref(x, noise, nw, style):
        B, C, H, W = x.shape
        x = x + nw.reshape(1, C, 1, 1) * noise
        x = jnp.where(x >= 0, x, 0.2 * x)
        mean = jnp.mean(x, axis=(2, 3), keepdims=True)
        xc = x - mean
        var = jnp.mean(xc * xc, axis=(2, 3), keepdims=True)
        x = xc * lax.rsqrt(var + 1e-8)
        s = style.reshape(B, 2, C)
        return x * (s[:, 0].reshape(B, C, 1, 1) + 1.0) + s[:, 1].reshape(B, C, 1, 1)

    x = jnp.repeat(jnp.repeat(x, 2, axis=2), 2, axis=3)
    s1 = fc_ref(dlatent[:, res * 2 - 4], params["style1_w_eff"], params["style1_b_eff"])
    x = epi_ref(x, noise_input[res * 2 - 4], params["noise1_w"], s1)
    x = lax.conv_general_dilated(
        x, params["conv1_w_eff"], window_strides=(1, 1), padding="SAME",
        dimension_numbers=("NCHW", "OIHW", "NCHW"))
    x = x + params["conv1_b_eff"].reshape(1, -1, 1, 1)
    s2 = fc_ref(dlatent[:, res * 2 - 3], params["style2_w_eff"], params["style2_b_eff"])
    x = epi_ref(x, noise_input[res * 2 - 3], params["noise2_w"], s2)
    return x


# ----------------------------------------------------------------------------
# Deterministic parameter construction (matches the module __init__ shapes)
# ----------------------------------------------------------------------------
def make_params(key, C, dlatent_size):
    ks = jax.random.split(key, 5)
    # FC inside ApplyStyle: gain=1.0, use_wscale=True -> w_lrmul = Dlat**-0.5
    fc_lrmul = dlatent_size ** (-0.5)
    w_s1 = jax.random.normal(ks[0], (2 * C, dlatent_size), jnp.float32)
    w_s2 = jax.random.normal(ks[1], (2 * C, dlatent_size), jnp.float32)
    # Conv2d(C, C, 3): gain=sqrt(2), use_wscale=True -> w_lrmul = sqrt(2)*(9C)**-0.5
    conv_lrmul = math.sqrt(2.0) * (C * 9) ** (-0.5)
    w_c = jax.random.normal(ks[2], (C, C, 3, 3), jnp.float32)     # OIHW
    # ApplyNoise weights (torch init is zeros; small randoms to exercise path)
    nw1 = 0.1 * jax.random.normal(ks[3], (C,), jnp.float32)
    nw2 = 0.1 * jax.random.normal(ks[4], (C,), jnp.float32)
    return {
        "style1_w_eff": (w_s1 * fc_lrmul).T,      # (Dlat, 2C)
        "style1_b_eff": jnp.zeros((2 * C,), jnp.float32),
        "style2_w_eff": (w_s2 * fc_lrmul).T,
        "style2_b_eff": jnp.zeros((2 * C,), jnp.float32),
        "conv1_w_eff": w_c * conv_lrmul,          # (Co, Ci, 3, 3) OIHW
        "conv1_b_eff": jnp.zeros((C,), jnp.float32),
        "noise1_w": nw1,
        "noise2_w": nw2,
    }


if __name__ == "__main__":
    key = jax.random.PRNGKey(0)
    k_par, k_x, k_dl, k_n4, k_n5 = jax.random.split(key, 5)

    res = 4
    B, C, H, W = 2, 32, 8, 8           # NCHW input; C = nf(res-2) = 32
    dlatent_size = 32
    n_layers = 8                       # needs >= res*2-3+1 = 6

    params = make_params(k_par, C, dlatent_size)

    x = jax.random.normal(k_x, (B, C, H, W), jnp.float32)
    dlatent = jax.random.normal(k_dl, (B, n_layers, dlatent_size), jnp.float32)

    # noise_input list; entries res*2-4 and res*2-3 are used; shape (B, 1, 2H, 2W)
    noise_input = [None] * n_layers
    noise_input[res * 2 - 4] = jax.random.normal(k_n4, (B, 1, 2 * H, 2 * W), jnp.float32)
    noise_input[res * 2 - 3] = jax.random.normal(k_n5, (B, 1, 2 * H, 2 * W), jnp.float32)

    out = jax.block_until_ready(gblock_forward(params, x, dlatent, noise_input, res))
    ref = jax.block_until_ready(reference_forward(params, x, dlatent, noise_input, res))

    assert out.shape == (B, C, 2 * H, 2 * W), out.shape
    max_err = float(jnp.max(jnp.abs(out - ref)))
    assert jnp.allclose(out, ref, rtol=2e-3, atol=2e-3), max_err

    print("KERNEL_OK")
</pallas_src>

<mosaic_0001>
module attributes {stable_mosaic.version = 11 : i64} {
  func.func @_gblock_kernel(%arg0: i32, %arg1: memref<1x32x64xf32, #tpu.memory_space<vmem>>, %arg2: memref<1x64x1xf32, #tpu.memory_space<vmem>>, %arg3: memref<128x64xf32, #tpu.memory_space<vmem>>, %arg4: memref<128x1xf32, #tpu.memory_space<vmem>>, %arg5: memref<64x256xf32, #tpu.memory_space<vmem>>, %arg6: memref<9x256xf32, #tpu.memory_space<vmem>>, %arg7: memref<1x1x256xf32, #tpu.memory_space<vmem>>, %arg8: memref<1x1x256xf32, #tpu.memory_space<vmem>>, %arg9: memref<32x2xf32, #tpu.memory_space<vmem>>, %arg10: memref<32x288xf32, #tpu.memory_space<vmem>>, %arg11: memref<32x1xf32, #tpu.memory_space<vmem>>, %arg12: memref<1x32x256xf32, #tpu.memory_space<vmem>>) attributes {dimension_semantics = [#tpu.dimension_semantics<parallel>], iteration_bounds = array<i64: 2>, scalar_prefetch = 0 : i64, scratch_operands = 0 : i64, tpu.core_type = #tpu.core_type<tc>, window_params = [{transform_indices = @transform_0, window_bounds = array<i64: 1, 32, 64>}, {transform_indices = @transform_1, window_bounds = array<i64: 1, 64, 1>}, {pipeline_mode = #tpu.pipeline_mode<synchronous>, transform_indices = @transform_2, window_bounds = array<i64: 128, 64>}, {pipeline_mode = #tpu.pipeline_mode<synchronous>, transform_indices = @transform_3, window_bounds = array<i64: 128, 1>}, {pipeline_mode = #tpu.pipeline_mode<synchronous>, transform_indices = @transform_4, window_bounds = array<i64: 64, 256>}, {pipeline_mode = #tpu.pipeline_mode<synchronous>, transform_indices = @transform_5, window_bounds = array<i64: 9, 256>}, {transform_indices = @transform_6, window_bounds = array<i64: 1, 1, 256>}, {transform_indices = @transform_7, window_bounds = array<i64: 1, 1, 256>}, {pipeline_mode = #tpu.pipeline_mode<synchronous>, transform_indices = @transform_8, window_bounds = array<i64: 32, 2>}, {pipeline_mode = #tpu.pipeline_mode<synchronous>, transform_indices = @transform_9, window_bounds = array<i64: 32, 288>}, {pipeline_mode = #tpu.pipeline_mode<synchronous>, transform_indices = @transform_10, window_bounds = array<i64: 32, 1>}, {transform_indices = @transform_11, window_bounds = array<i64: 1, 32, 256>}]} {
    %c0 = arith.constant 0 : index
    %c0_0 = arith.constant 0 : index
    %0 = vector.load %arg3[%c0, %c0_0] : memref<128x64xf32, #tpu.memory_space<vmem>>, vector<128x64xf32>
    %c0_1 = arith.constant 0 : index
    %c0_2 = arith.constant 0 : index
    %c0_3 = arith.constant 0 : index
    %1 = vector.load %arg2[%c0_1, %c0_2, %c0_3] : memref<1x64x1xf32, #tpu.memory_space<vmem>>, vector<1x64x1xf32>
    %2 = vector.shape_cast %1 : vector<1x64x1xf32> to vector<64x1xf32>
    %cst = arith.constant dense<0.000000e+00> : vector<128x1xf32>
    %3 = tpu.matmul %0, %2, %cst {dimension_numbers = #tpu.dot_dimension_numbers<[1], [0], [0], [1], [0, 0, 1, 1], [], []>} : vector<128x64xf32>, vector<64x1xf32>, vector<128x1xf32> -> vector<128x1xf32>
    %c0_4 = arith.constant 0 : index
    %c0_5 = arith.constant 0 : index
    %4 = vector.load %arg4[%c0_4, %c0_5] : memref<128x1xf32, #tpu.memory_space<vmem>>, vector<128x1xf32>
    %5 = arith.addf %3, %4 : vector<128x1xf32>
    %cst_6 = arith.constant 0.000000e+00 : f32
    %6 = vector.broadcast %cst_6 : f32 to vector<128x1xf32>
    %7 = arith.cmpf oge, %5, %6 : vector<128x1xf32>
    %cst_7 = arith.constant 2.000000e-01 : f32
    %8 = vector.broadcast %cst_7 : f32 to vector<128x1xf32>
    %9 = arith.mulf %8, %5 : vector<128x1xf32>
    %10 = arith.select %7, %5, %9 : vector<128x1xi1>, vector<128x1xf32>
    %c0_8 = arith.constant 0 : index
    %c0_9 = arith.constant 0 : index
    %11 = vector.load %arg9[%c0_8, %c0_9] : memref<32x2xf32, #tpu.memory_space<vmem>>, vector<32x2xf32>
    %c0_10 = arith.constant 0 : index
    %c0_11 = arith.constant 0 : index
    %c0_12 = arith.constant 0 : index
    %12 = vector.load %arg1[%c0_10, %c0_11, %c0_12] : memref<1x32x64xf32, #tpu.memory_space<vmem>>, vector<1x32x64xf32>
    %13 = vector.shape_cast %12 : vector<1x32x64xf32> to vector<32x64xf32>
    %c0_13 = arith.constant 0 : index
    %c0_14 = arith.constant 0 : index
    %14 = vector.load %arg5[%c0_13, %c0_14] : memref<64x256xf32, #tpu.memory_space<vmem>>, vector<64x256xf32>
    %cst_15 = arith.constant dense<0.000000e+00> : vector<32x256xf32>
    %15 = tpu.matmul %13, %14, %cst_15 {dimension_numbers = #tpu.dot_dimension_numbers<[1], [0], [0], [1], [0, 0, 1, 1], [], []>} : vector<32x64xf32>, vector<64x256xf32>, vector<32x256xf32> -> vector<32x256xf32>
    %c0_16 = arith.constant 0 : index
    %c0_17 = arith.constant 0 : index
    %c0_18 = arith.constant 0 : index
    %16 = vector.load %arg7[%c0_16, %c0_17, %c0_18] : memref<1x1x256xf32, #tpu.memory_space<vmem>>, vector<1x1x256xf32>
    %17 = vector.shape_cast %16 : vector<1x1x256xf32> to vector<1x256xf32>
    %18 = vector.extract_strided_slice %11 {offsets = [0, 0], sizes = [32, 1], strides = [1, 1]} : vector<32x2xf32> to vector<32x1xf32>
    %19 = vector.extract_strided_slice %10 {offsets = [0, 0], sizes = [32, 1], strides = [1, 1]} : vector<128x1xf32> to vector<32x1xf32>
    %20 = vector.extract_strided_slice %10 {offsets = [32, 0], sizes = [32, 1], strides = [1, 1]} : vector<128x1xf32> to vector<32x1xf32>
    %21 = vector.broadcast %18 : vector<32x1xf32> to vector<32x256xf32>
    %22 = vector.broadcast %17 : vector<1x256xf32> to vector<32x256xf32>
    %23 = arith.mulf %21, %22 : vector<32x256xf32>
    %24 = arith.addf %15, %23 : vector<32x256xf32>
    %cst_19 = arith.constant 0.000000e+00 : f32
    %25 = vector.broadcast %cst_19 : f32 to vector<32x256xf32>
    %26 = arith.cmpf oge, %24, %25 : vector<32x256xf32>
    %cst_20 = arith.constant 2.000000e-01 : f32
    %27 = vector.broadcast %cst_20 : f32 to vector<32x256xf32>
    %28 = arith.mulf %27, %24 : vector<32x256xf32>
    %29 = arith.select %26, %24, %28 : vector<32x256xi1>, vector<32x256xf32>
    %cst_21 = arith.constant dense<0.000000e+00> : vector<32xf32>
    %30 = vector.multi_reduction <add>, %29, %cst_21 [1] : vector<32x256xf32> to vector<32xf32>
    %31 = vector.shape_cast %30 : vector<32xf32> to vector<32x1xf32>
    %cst_22 = arith.constant 3.906250e-03 : f32
    %32 = vector.broadcast %cst_22 : f32 to vector<32x1xf32>
    %33 = arith.mulf %31, %32 : vector<32x1xf32>
    %34 = vector.broadcast %33 : vector<32x1xf32> to vector<32x256xf32>
    %35 = arith.subf %29, %34 : vector<32x256xf32>
    %36 = arith.mulf %35, %35 : vector<32x256xf32>
    %cst_23 = arith.constant dense<0.000000e+00> : vector<32xf32>
    %37 = vector.multi_reduction <add>, %36, %cst_23 [1] : vector<32x256xf32> to vector<32xf32>
    %38 = vector.shape_cast %37 : vector<32xf32> to vector<32x1xf32>
    %cst_24 = arith.constant 3.906250e-03 : f32
    %39 = vector.broadcast %cst_24 : f32 to vector<32x1xf32>
    %40 = arith.mulf %38, %39 : vector<32x1xf32>
    %cst_25 = arith.constant 9.99999993E-9 : f32
    %41 = vector.broadcast %cst_25 : f32 to vector<32x1xf32>
    %42 = arith.addf %40, %41 : vector<32x1xf32>
    %43 = math.rsqrt %42 : vector<32x1xf32>
    %44 = vector.broadcast %43 : vector<32x1xf32> to vector<32x256xf32>
    %45 = arith.mulf %35, %44 : vector<32x256xf32>
    %cst_26 = arith.constant 1.000000e+00 : f32
    %46 = vector.broadcast %cst_26 : f32 to vector<32x1xf32>
    %47 = arith.addf %19, %46 : vector<32x1xf32>
    %48 = vector.broadcast %47 : vector<32x1xf32> to vector<32x256xf32>
    %49 = arith.mulf %45, %48 : vector<32x256xf32>
    %50 = vector.broadcast %20 : vector<32x1xf32> to vector<32x256xf32>
    %51 = arith.addf %49, %50 : vector<32x256xf32>
    %c17_i32 = arith.constant 17 : i32
    %52 = tpu.dynamic_rotate %51 by %c17_i32 dim 1 : vector<32x256xf32>, i32 -> vector<32x256xf32>
    %c0_27 = arith.constant 0 : index
    %c0_28 = arith.constant 0 : index
    %53 = vector.load %arg6[%c0_27, %c0_28] : memref<9x256xf32, #tpu.memory_space<vmem>>, vector<1x256xf32>
    %54 = vector.broadcast %53 : vector<1x256xf32> to vector<32x256xf32>
    %55 = arith.mulf %52, %54 : vector<32x256xf32>
    %c16_i32 = arith.constant 16 : i32
    %56 = tpu.dynamic_rotate %51 by %c16_i32 dim 1 : vector<32x256xf32>, i32 -> vector<32x256xf32>
    %c1 = arith.constant 1 : index
    %c0_29 = arith.constant 0 : index
    %57 = vector.load %arg6[%c1, %c0_29] : memref<9x256xf32, #tpu.memory_space<vmem>>, vector<1x256xf32>
    %58 = vector.broadcast %57 : vector<1x256xf32> to vector<32x256xf32>
    %59 = arith.mulf %56, %58 : vector<32x256xf32>
    %c15_i32 = arith.constant 15 : i32
    %60 = tpu.dynamic_rotate %51 by %c15_i32 dim 1 : vector<32x256xf32>, i32 -> vector<32x256xf32>
    %c2 = arith.constant 2 : index
    %c0_30 = arith.constant 0 : index
    %61 = vector.load %arg6[%c2, %c0_30] : memref<9x256xf32, #tpu.memory_space<vmem>>, vector<1x256xf32>
    %62 = vector.broadcast %61 : vector<1x256xf32> to vector<32x256xf32>
    %63 = arith.mulf %60, %62 : vector<32x256xf32>
    %c1_i32 = arith.constant 1 : i32
    %64 = tpu.dynamic_rotate %51 by %c1_i32 dim 1 : vector<32x256xf32>, i32 -> vector<32x256xf32>
    %c3 = arith.constant 3 : index
    %c0_31 = arith.constant 0 : index
    %65 = vector.load %arg6[%c3, %c0_31] : memref<9x256xf32, #tpu.memory_space<vmem>>, vector<1x256xf32>
    %66 = vector.broadcast %65 : vector<1x256xf32> to vector<32x256xf32>
    %67 = arith.mulf %64, %66 : vector<32x256xf32>
    %c255_i32 = arith.constant 255 : i32
    %68 = tpu.dynamic_rotate %51 by %c255_i32 dim 1 : vector<32x256xf32>, i32 -> vector<32x256xf32>
    %c5 = arith.constant 5 : index
    %c0_32 = arith.constant 0 : index
    %69 = vector.load %arg6[%c5, %c0_32] : memref<9x256xf32, #tpu.memory_space<vmem>>, vector<1x256xf32>
    %70 = vector.broadcast %69 : vector<1x256xf32> to vector<32x256xf32>
    %71 = arith.mulf %68, %70 : vector<32x256xf32>
    %c241_i32 = arith.constant 241 : i32
    %72 = tpu.dynamic_rotate %51 by %c241_i32 dim 1 : vector<32x256xf32>, i32 -> vector<32x256xf32>
    %c6 = arith.constant 6 : index
    %c0_33 = arith.constant 0 : index
    %73 = vector.load %arg6[%c6, %c0_33] : memref<9x256xf32, #tpu.memory_space<vmem>>, vector<1x256xf32>
    %74 = vector.broadcast %73 : vector<1x256xf32> to vector<32x256xf32>
    %75 = arith.mulf %72, %74 : vector<32x256xf32>
    %c240_i32 = arith.constant 240 : i32
    %76 = tpu.dynamic_rotate %51 by %c240_i32 dim 1 : vector<32x256xf32>, i32 -> vector<32x256xf32>
    %c7 = arith.constant 7 : index
    %c0_34 = arith.constant 0 : index
    %77 = vector.load %arg6[%c7, %c0_34] : memref<9x256xf32, #tpu.memory_space<vmem>>, vector<1x256xf32>
    %78 = vector.broadcast %77 : vector<1x256xf32> to vector<32x256xf32>
    %79 = arith.mulf %76, %78 : vector<32x256xf32>
    %c239_i32 = arith.constant 239 : i32
    %80 = tpu.dynamic_rotate %51 by %c239_i32 dim 1 : vector<32x256xf32>, i32 -> vector<32x256xf32>
    %c8 = arith.constant 8 : index
    %c0_35 = arith.constant 0 : index
    %81 = vector.load %arg6[%c8, %c0_35] : memref<9x256xf32, #tpu.memory_space<vmem>>, vector<1x256xf32>
    %82 = vector.broadcast %81 : vector<1x256xf32> to vector<32x256xf32>
    %83 = arith.mulf %80, %82 : vector<32x256xf32>
    %84 = tpu.concatenate %55, %59, %63, %67, %51, %71, %75, %79, %83 in 0 : vector<32x256xf32>, vector<32x256xf32>, vector<32x256xf32>, vector<32x256xf32>, vector<32x256xf32>, vector<32x256xf32>, vector<32x256xf32>, vector<32x256xf32>, vector<32x256xf32> -> vector<288x256xf32>
    %c0_36 = arith.constant 0 : index
    %c0_37 = arith.constant 0 : index
    %85 = vector.load %arg10[%c0_36, %c0_37] : memref<32x288xf32, #tpu.memory_space<vmem>>, vector<32x288xf32>
    %cst_38 = arith.constant dense<0.000000e+00> : vector<32x256xf32>
    %86 = tpu.matmul %85, %84, %cst_38 {dimension_numbers = #tpu.dot_dimension_numbers<[1], [0], [0], [1], [0, 0, 1, 1], [], []>} : vector<32x288xf32>, vector<288x256xf32>, vector<32x256xf32> -> vector<32x256xf32>
    %c0_39 = arith.constant 0 : index
    %c0_40 = arith.constant 0 : index
    %87 = vector.load %arg11[%c0_39, %c0_40] : memref<32x1xf32, #tpu.memory_space<vmem>>, vector<32x1xf32>
    %88 = vector.broadcast %87 : vector<32x1xf32> to vector<32x256xf32>
    %89 = arith.addf %86, %88 : vector<32x256xf32>
    %c0_41 = arith.constant 0 : index
    %c0_42 = arith.constant 0 : index
    %c0_43 = arith.constant 0 : index
    %90 = vector.load %arg8[%c0_41, %c0_42, %c0_43] : memref<1x1x256xf32, #tpu.memory_space<vmem>>, vector<1x1x256xf32>
    %91 = vector.shape_cast %90 : vector<1x1x256xf32> to vector<1x256xf32>
    %92 = vector.extract_strided_slice %11 {offsets = [0, 1], sizes = [32, 1], strides = [1, 1]} : vector<32x2xf32> to vector<32x1xf32>
    %93 = vector.extract_strided_slice %10 {offsets = [64, 0], sizes = [32, 1], strides = [1, 1]} : vector<128x1xf32> to vector<32x1xf32>
    %94 = vector.extract_strided_slice %10 {offsets = [96, 0], sizes = [32, 1], strides = [1, 1]} : vector<128x1xf32> to vector<32x1xf32>
    %95 = vector.broadcast %92 : vector<32x1xf32> to vector<32x256xf32>
    %96 = vector.broadcast %91 : vector<1x256xf32> to vector<32x256xf32>
    %97 = arith.mulf %95, %96 : vector<32x256xf32>
    %98 = arith.addf %89, %97 : vector<32x256xf32>
    %cst_44 = arith.constant 0.000000e+00 : f32
    %99 = vector.broadcast %cst_44 : f32 to vector<32x256xf32>
    %100 = arith.cmpf oge, %98, %99 : vector<32x256xf32>
    %cst_45 = arith.constant 2.000000e-01 : f32
    %101 = vector.broadcast %cst_45 : f32 to vector<32x256xf32>
    %102 = arith.mulf %101, %98 : vector<32x256xf32>
    %103 = arith.select %100, %98, %102 : vector<32x256xi1>, vector<32x256xf32>
    %cst_46 = arith.constant dense<0.000000e+00> : vector<32xf32>
    %104 = vector.multi_reduction <add>, %103, %cst_46 [1] : vector<32x256xf32> to vector<32xf32>
    %105 = vector.shape_cast %104 : vector<32xf32> to vector<32x1xf32>
    %cst_47 = arith.constant 3.906250e-03 : f32
    %106 = vector.broadcast %cst_47 : f32 to vector<32x1xf32>
    %107 = arith.mulf %105, %106 : vector<32x1xf32>
    %108 = vector.broadcast %107 : vector<32x1xf32> to vector<32x256xf32>
    %109 = arith.subf %103, %108 : vector<32x256xf32>
    %110 = arith.mulf %109, %109 : vector<32x256xf32>
    %cst_48 = arith.constant dense<0.000000e+00> : vector<32xf32>
    %111 = vector.multi_reduction <add>, %110, %cst_48 [1] : vector<32x256xf32> to vector<32xf32>
    %112 = vector.shape_cast %111 : vector<32xf32> to vector<32x1xf32>
    %cst_49 = arith.constant 3.906250e-03 : f32
    %113 = vector.broadcast %cst_49 : f32 to vector<32x1xf32>
    %114 = arith.mulf %112, %113 : vector<32x1xf32>
    %cst_50 = arith.constant 9.99999993E-9 : f32
    %115 = vector.broadcast %cst_50 : f32 to vector<32x1xf32>
    %116 = arith.addf %114, %115 : vector<32x1xf32>
    %117 = math.rsqrt %116 : vector<32x1xf32>
    %118 = vector.broadcast %117 : vector<32x1xf32> to vector<32x256xf32>
    %119 = arith.mulf %109, %118 : vector<32x256xf32>
    %cst_51 = arith.constant 1.000000e+00 : f32
    %120 = vector.broadcast %cst_51 : f32 to vector<32x1xf32>
    %121 = arith.addf %93, %120 : vector<32x1xf32>
    %122 = vector.broadcast %121 : vector<32x1xf32> to vector<32x256xf32>
    %123 = arith.mulf %119, %122 : vector<32x256xf32>
    %124 = vector.broadcast %94 : vector<32x1xf32> to vector<32x256xf32>
    %125 = arith.addf %123, %124 : vector<32x256xf32>
    %c0_52 = arith.constant 0 : index
    %c0_53 = arith.constant 0 : index
    %c0_54 = arith.constant 0 : index
    %126 = vector.load %arg12[%c0_52, %c0_53, %c0_54] : memref<1x32x256xf32, #tpu.memory_space<vmem>>, vector<1x32x256xf32>
    %127 = vector.shape_cast %126 : vector<1x32x256xf32> to vector<32x256xf32>
    %128 = vector.shape_cast %125 : vector<32x256xf32> to vector<1x32x256xf32>
    tpu.vector_store %arg12[%c0_52, %c0_53, %c0_54], %128 {strides = array<i32>} : memref<1x32x256xf32, #tpu.memory_space<vmem>>, vector<1x32x256xf32>,
    return
  }
  func.func @transform_0(%arg0: i32) -> (i32, i32, i32) {
    %c0_i32 = arith.constant 0 : i32
    %c0_i32_0 = arith.constant 0 : i32
    %c0_i32_1 = arith.constant 0 : i32
    return %arg0, %c0_i32, %c0_i32_0 : i32, i32, i32
  }
  func.func @transform_1(%arg0: i32) -> (i32, i32, i32) {
    %c0_i32 = arith.constant 0 : i32
    %c0_i32_0 = arith.constant 0 : i32
    %c0_i32_1 = arith.constant 0 : i32
    return %arg0, %c0_i32, %c0_i32_0 : i32, i32, i32
  }
  func.func @transform_2(%arg0: i32) -> (i32, i32) {
    %c0_i32 = arith.constant 0 : i32
    %c0_i32_0 = arith.constant 0 : i32
    %c0_i32_1 = arith.constant 0 : i32
    return %c0_i32, %c0_i32_0 : i32, i32
  }
  func.func @transform_3(%arg0: i32) -> (i32, i32) {
    %c0_i32 = arith.constant 0 : i32
    %c0_i32_0 = arith.constant 0 : i32
    %c0_i32_1 = arith.constant 0 : i32
    return %c0_i32, %c0_i32_0 : i32, i32
  }
  func.func @transform_4(%arg0: i32) -> (i32, i32) {
    %c0_i32 = arith.constant 0 : i32
    %c0_i32_0 = arith.constant 0 : i32
    %c0_i32_1 = arith.constant 0 : i32
    return %c0_i32, %c0_i32_0 : i32, i32
  }
  func.func @transform_5(%arg0: i32) -> (i32, i32) {
    %c0_i32 = arith.constant 0 : i32
    %c0_i32_0 = arith.constant 0 : i32
    %c0_i32_1 = arith.constant 0 : i32
    return %c0_i32, %c0_i32_0 : i32, i32
  }
  func.func @transform_6(%arg0: i32) -> (i32, i32, i32) {
    %c0_i32 = arith.constant 0 : i32
    %c0_i32_0 = arith.constant 0 : i32
    %c0_i32_1 = arith.constant 0 : i32
    return %arg0, %c0_i32, %c0_i32_0 : i32, i32, i32
  }
  func.func @transform_7(%arg0: i32) -> (i32, i32, i32) {
    %c0_i32 = arith.constant 0 : i32
    %c0_i32_0 = arith.constant 0 : i32
    %c0_i32_1 = arith.constant 0 : i32
    return %arg0, %c0_i32, %c0_i32_0 : i32, i32, i32
  }
  func.func @transform_8(%arg0: i32) -> (i32, i32) {
    %c0_i32 = arith.constant 0 : i32
    %c0_i32_0 = arith.constant 0 : i32
    %c0_i32_1 = arith.constant 0 : i32
    return %c0_i32, %c0_i32_0 : i32, i32
  }
  func.func @transform_9(%arg0: i32) -> (i32, i32) {
    %c0_i32 = arith.constant 0 : i32
    %c0_i32_0 = arith.constant 0 : i32
    %c0_i32_1 = arith.constant 0 : i32
    return %c0_i32, %c0_i32_0 : i32, i32
  }
  func.func @transform_10(%arg0: i32) -> (i32, i32) {
    %c0_i32 = arith.constant 0 : i32
    %c0_i32_0 = arith.constant 0 : i32
    %c0_i32_1 = arith.constant 0 : i32
    return %c0_i32, %c0_i32_0 : i32, i32
  }
  func.func @transform_11(%arg0: i32) -> (i32, i32, i32) {
    %c0_i32 = arith.constant 0 : i32
    %c0_i32_0 = arith.constant 0 : i32
    %c0_i32_1 = arith.constant 0 : i32
    return %arg0, %c0_i32, %c0_i32_0 : i32, i32, i32
  }
}

</mosaic_0001>

<llo_original>
// kernel: tpu_custom_call.1
$region0: #{tpu_custom_call.1}
  #allocation0 [shape = 'u32[]', space=smem, size = 0x4, offset = 0x4, fixed_abs, tag = 'smem constant byte address 0x4 - core index']
  #allocation1 [shape = 'u32[72,128]{1,0:T(1,128)}', space=vmem, size = 0x9000, scoped, tag = 'internal scratch']
  %s0 = inlined_call_operand.vmem [shape: f32[2,32,64], index: 0, kind: input, shape index: {}]
  %s1 = inlined_call_operand.vmem [shape: f32[2,64,1], index: 1, kind: input, shape index: {}]
  %s2 = inlined_call_operand.vmem [shape: f32[128,64], index: 2, kind: input, shape index: {}]
  %s3 = inlined_call_operand.vmem [shape: f32[128,1], index: 3, kind: input, shape index: {}]
  %s4 = inlined_call_operand.vmem [shape: f32[64,256], index: 4, kind: input, shape index: {}]
  %s5 = inlined_call_operand.vmem [shape: f32[9,256], index: 5, kind: input, shape index: {}]
  %s6 = inlined_call_operand.vmem [shape: f32[2,1,256], index: 6, kind: input, shape index: {}]
  %s7 = inlined_call_operand.vmem [shape: f32[2,1,256], index: 7, kind: input, shape index: {}]
  %s8 = inlined_call_operand.vmem [shape: f32[32,2], index: 8, kind: input, shape index: {}]
  %s9 = inlined_call_operand.vmem [shape: f32[32,288], index: 9, kind: input, shape index: {}]
  %s10 = inlined_call_operand.vmem [shape: f32[32,1], index: 10, kind: input, shape index: {}]
  %s11 = inlined_call_operand.hbm [shape: f32[2,32,256], index: 11, kind: output, shape index: {}]
  %s12 = sld [smem:[#allocation0]]
  $region77: #{tpu_custom_call.1} parent=0
    _
  %s14 = ssub.s32 1, %s12
  %s15 = scalar_select 0, %s14, %s12
  $region1: #{tpu_custom_call.1} parent=0
    #allocation2 [shape = 'u8[65536]{0}', space=vmem, size = 0x10000, scoped, tag = 'output window, operand 0']
    #allocation3 [shape = 's32[2]{0}', space=sflag, size = 0x8, scoped, tag = 'scoped memory for tpu_custom_call.1']
    %16 = vsyncpa [#allocation3], 0
    %s17 = scalar_lea.sflag [#allocation3], 1
    %18 = vsyncpa %s17, 0
    loop: start=0, step=1, limit=4
    $region2: #{tpu_custom_call.1} parent=1 // loop_pre_header
      _
    $region3: #{tpu_custom_call.1} parent=1 // loop_header
      %s20 = sphi 0, %s24
      %p21 = scmp.ge.s32.totalorder %s20, 4
      %s30 = sphi 0, %s32
      %s33 = sphi 0, %s30
      %s34 = sphi 0, %s33
      %s50 = sphi 0, %s34
      %s56 = sphi 0, %s58
      %s59 = sphi 0, %s56
      %s60 = sphi 0, %s59
      %s76 = sphi 0, %s60
      %s80 = sphi 0, %s80
      %s82 = sphi 0, %s80
      %s83 = sphi 0, %s82
      %s97 = sphi 0, %s83
      %s101 = sphi 0, %s101
      %s103 = sphi 0, %s101
      %s104 = sphi 0, %s103
      %s118 = sphi 0, %s104
      %s122 = sphi 0, %s122
      %s124 = sphi 0, %s122
      %s125 = sphi 0, %s124
      %s139 = sphi 0, %s125
      %s143 = sphi 0, %s143
      %s145 = sphi 0, %s143
      %s146 = sphi 0, %s145
      %s160 = sphi 0, %s146
      %s166 = sphi 0, %s168
      %s169 = sphi 0, %s166
      %s170 = sphi 0, %s169
      %s186 = sphi 0, %s170
      %s192 = sphi 0, %s194
      %s195 = sphi 0, %s192
      %s196 = sphi 0, %s195
      %s212 = sphi 0, %s196
      %s216 = sphi 0, %s216
      %s218 = sphi 0, %s216
      %s219 = sphi 0, %s218
      %s233 = sphi 0, %s219
      %s237 = sphi 0, %s237
      %s239 = sphi 0, %s237
      %s240 = sphi 0, %s239
      %s254 = sphi 0, %s240
      %s258 = sphi 0, %s258
      %s260 = sphi 0, %s258
      %s261 = sphi 0, %s260
      %s275 = sphi 0, %s261
      %s281 = sphi 0, %s283
      %s284 = sphi 0, %s281
      %s285 = sphi 0, %s284
      %s301 = sphi 0, %s285
    $region4: #{tpu_custom_call.1} parent=1 // loop_header_branch
      %23 = sbr.rel (%p21) target = $region8
    $region5: #{tpu_custom_call.1} parent=1 // loop_body
      %s25 = ssub.s32 %s20, 1
      %s26 = ssub.s32 %s20, 2
      %s27 = sadd.s32 %s20, 1
      %s28 = ssub.s32 %s20, %s27
      %p29 = scmp.eq.s32.totalorder %s28, 0
      %s31 = sadd.s32 %s30, 1
      %s32 = scalar_select %p29, %s30, %s31
      %p35 = pneg %p29
      %p36 = scmp.eq.s32.totalorder %s20, 1
      %p37 = por %p35, %p36
      %p38 = scmp.ne.s32.totalorder %s30, %s33
      %p39 = scmp.eq.s32.totalorder %s20, 0
      %p40 = por %p38, %p39
      %p41 = scmp.ne.s32.totalorder %s30, %s33
      %p42 = scmp.eq.s32.totalorder %s25, 1
      %p43 = por %p41, %p42
      %p44 = scmp.ne.s32.totalorder %s33, %s34
      %p45 = scmp.eq.s32.totalorder %s25, 0
      %p46 = por %p44, %p45
      %p47 = scmp.ne.s32.totalorder %s33, %s34
      %p48 = scmp.eq.s32.totalorder %s26, 1
      %p49 = por %p47, %p48
      %p51 = scmp.ne.s32.totalorder %s34, %s50
      %p52 = scmp.eq.s32.totalorder %s26, 0
      %p53 = por %p51, %p52
      %s54 = ssub.s32 %s20, %s27
      %p55 = scmp.eq.s32.totalorder %s54, 0
      %s57 = sadd.s32 %s56, 1
      %s58 = scalar_select %p55, %s56, %s57
      %p61 = pneg %p55
      %p62 = scmp.eq.s32.totalorder %s20, 1
      %p63 = por %p61, %p62
      %p64 = scmp.ne.s32.totalorder %s56, %s59
      %p65 = scmp.eq.s32.totalorder %s20, 0
      %p66 = por %p64, %p65
      %p67 = scmp.ne.s32.totalorder %s56, %s59
      %p68 = scmp.eq.s32.totalorder %s25, 1
      %p69 = por %p67, %p68
      %p70 = scmp.ne.s32.totalorder %s59, %s60
      %p71 = scmp.eq.s32.totalorder %s25, 0
      %p72 = por %p70, %p71
      %p73 = scmp.ne.s32.totalorder %s59, %s60
      %p74 = scmp.eq.s32.totalorder %s26, 1
      %p75 = por %p73, %p74
      %p77 = scmp.ne.s32.totalorder %s60, %s76
      %p78 = scmp.eq.s32.totalorder %s26, 0
      %p79 = por %p77, %p78
      %s81 = sadd.s32 %s80, 1
      %p84 = scmp.eq.s32.totalorder %s20, 1
      %p85 = scmp.ne.s32.totalorder %s80, %s82
      %p86 = scmp.eq.s32.totalorder %s20, 0
      %p87 = por %p85, %p86
      %p88 = scmp.ne.s32.totalorder %s80, %s82
      %p89 = scmp.eq.s32.totalorder %s25, 1
      %p90 = por %p88, %p89
      %p91 = scmp.ne.s32.totalorder %s82, %s83
      %p92 = scmp.eq.s32.totalorder %s25, 0
      %p93 = por %p91, %p92
      %p94 = scmp.ne.s32.totalorder %s82, %s83
      %p95 = scmp.eq.s32.totalorder %s26, 1
      %p96 = por %p94, %p95
      %p98 = scmp.ne.s32.totalorder %s83, %s97
      %p99 = scmp.eq.s32.totalorder %s26, 0
      %p100 = por %p98, %p99
      %s102 = sadd.s32 %s101, 1
      %p105 = scmp.eq.s32.totalorder %s20, 1
      %p106 = scmp.ne.s32.totalorder %s101, %s103
      %p107 = scmp.eq.s32.totalorder %s20, 0
      %p108 = por %p106, %p107
      %p109 = scmp.ne.s32.totalorder %s101, %s103
      %p110 = scmp.eq.s32.totalorder %s25, 1
      %p111 = por %p109, %p110
      %p112 = scmp.ne.s32.totalorder %s103, %s104
      %p113 = scmp.eq.s32.totalorder %s25, 0
      %p114 = por %p112, %p113
      %p115 = scmp.ne.s32.totalorder %s103, %s104
      %p116 = scmp.eq.s32.totalorder %s26, 1
      %p117 = por %p115, %p116
      %p119 = scmp.ne.s32.totalorder %s104, %s118
      %p120 = scmp.eq.s32.totalorder %s26, 0
      %p121 = por %p119, %p120
      %s123 = sadd.s32 %s122, 1
      %p126 = scmp.eq.s32.totalorder %s20, 1
      %p127 = scmp.ne.s32.totalorder %s122, %s124
      %p128 = scmp.eq.s32.totalorder %s20, 0
      %p129 = por %p127, %p128
      %p130 = scmp.ne.s32.totalorder %s122, %s124
      %p131 = scmp.eq.s32.totalorder %s25, 1
      %p132 = por %p130, %p131
      %p133 = scmp.ne.s32.totalorder %s124, %s125
      %p134 = scmp.eq.s32.totalorder %s25, 0
      %p135 = por %p133, %p134
      %p136 = scmp.ne.s32.totalorder %s124, %s125
      %p137 = scmp.eq.s32.totalorder %s26, 1
      %p138 = por %p136, %p137
      %p140 = scmp.ne.s32.totalorder %s125, %s139
      %p141 = scmp.eq.s32.totalorder %s26, 0
      %p142 = por %p140, %p141
      %s144 = sadd.s32 %s143, 1
      %p147 = scmp.eq.s32.totalorder %s20, 1
      %p148 = scmp.ne.s32.totalorder %s143, %s145
      %p149 = scmp.eq.s32.totalorder %s20, 0
      %p150 = por %p148, %p149
      %p151 = scmp.ne.s32.totalorder %s143, %s145
      %p152 = scmp.eq.s32.totalorder %s25, 1
      %p153 = por %p151, %p152
      %p154 = scmp.ne.s32.totalorder %s145, %s146
      %p155 = scmp.eq.s32.totalorder %s25, 0
      %p156 = por %p154, %p155
      %p157 = scmp.ne.s32.totalorder %s145, %s146
      %p158 = scmp.eq.s32.totalorder %s26, 1
      %p159 = por %p157, %p158
      %p161 = scmp.ne.s32.totalorder %s146, %s160
      %p162 = scmp.eq.s32.totalorder %s26, 0
      %p163 = por %p161, %p162
      %s164 = ssub.s32 %s20, %s27
      %p165 = scmp.eq.s32.totalorder %s164, 0
      %s167 = sadd.s32 %s166, 1
      %s168 = scalar_select %p165, %s166, %s167
      %p171 = pneg %p165
      %p172 = scmp.eq.s32.totalorder %s20, 1
      %p173 = por %p171, %p172
      %p174 = scmp.ne.s32.totalorder %s166, %s169
      %p175 = scmp.eq.s32.totalorder %s20, 0
      %p176 = por %p174, %p175
      %p177 = scmp.ne.s32.totalorder %s166, %s169
      %p178 = scmp.eq.s32.totalorder %s25, 1
      %p179 = por %p177, %p178
      %p180 = scmp.ne.s32.totalorder %s169, %s170
      %p181 = scmp.eq.s32.totalorder %s25, 0
      %p182 = por %p180, %p181
      %p183 = scmp.ne.s32.totalorder %s169, %s170
      %p184 = scmp.eq.s32.totalorder %s26, 1
      %p185 = por %p183, %p184
      %p187 = scmp.ne.s32.totalorder %s170, %s186
      %p188 = scmp.eq.s32.totalorder %s26, 0
      %p189 = por %p187, %p188
      %s190 = ssub.s32 %s20, %s27
      %p191 = scmp.eq.s32.totalorder %s190, 0
      %s193 = sadd.s32 %s192, 1
      %s194 = scalar_select %p191, %s192, %s193
      %p197 = pneg %p191
      %p198 = scmp.eq.s32.totalorder %s20, 1
      %p199 = por %p197, %p198
      %p200 = scmp.ne.s32.totalorder %s192, %s195
      %p201 = scmp.eq.s32.totalorder %s20, 0
      %p202 = por %p200, %p201
      %p203 = scmp.ne.s32.totalorder %s192, %s195
      %p204 = scmp.eq.s32.totalorder %s25, 1
      %p205 = por %p203, %p204
      %p206 = scmp.ne.s32.totalorder %s195, %s196
      %p207 = scmp.eq.s32.totalorder %s25, 0
      %p208 = por %p206, %p207
      %p209 = scmp.ne.s32.totalorder %s195, %s196
      %p210 = scmp.eq.s32.totalorder %s26, 1
      %p211 = por %p209, %p210
      %p213 = scmp.ne.s32.totalorder %s196, %s212
      %p214 = scmp.eq.s32.totalorder %s26, 0
      %p215 = por %p213, %p214
      %s217 = sadd.s32 %s216, 1
      %p220 = scmp.eq.s32.totalorder %s20, 1
      %p221 = scmp.ne.s32.totalorder %s216, %s218
      %p222 = scmp.eq.s32.totalorder %s20, 0
      %p223 = por %p221, %p222
      %p224 = scmp.ne.s32.totalorder %s216, %s218
      %p225 = scmp.eq.s32.totalorder %s25, 1
      %p226 = por %p224, %p225
      %p227 = scmp.ne.s32.totalorder %s218, %s219
      %p228 = scmp.eq.s32.totalorder %s25, 0
      %p229 = por %p227, %p228
      %p230 = scmp.ne.s32.totalorder %s218, %s219
      %p231 = scmp.eq.s32.totalorder %s26, 1
      %p232 = por %p230, %p231
      %p234 = scmp.ne.s32.totalorder %s219, %s233
      %p235 = scmp.eq.s32.totalorder %s26, 0
      %p236 = por %p234, %p235
      %s238 = sadd.s32 %s237, 1
      %p241 = scmp.eq.s32.totalorder %s20, 1
      %p242 = scmp.ne.s32.totalorder %s237, %s239
      %p243 = scmp.eq.s32.totalorder %s20, 0
      %p244 = por %p242, %p243
      %p245 = scmp.ne.s32.totalorder %s237, %s239
      %p246 = scmp.eq.s32.totalorder %s25, 1
      %p247 = por %p245, %p246
      %p248 = scmp.ne.s32.totalorder %s239, %s240
      %p249 = scmp.eq.s32.totalorder %s25, 0
      %p250 = por %p248, %p249
      %p251 = scmp.ne.s32.totalorder %s239, %s240
      %p252 = scmp.eq.s32.totalorder %s26, 1
      %p253 = por %p251, %p252
      %p255 = scmp.ne.s32.totalorder %s240, %s254
      %p256 = scmp.eq.s32.totalorder %s26, 0
      %p257 = por %p255, %p256
      %s259 = sadd.s32 %s258, 1
      %p262 = scmp.eq.s32.totalorder %s20, 1
      %p263 = scmp.ne.s32.totalorder %s258, %s260
      %p264 = scmp.eq.s32.totalorder %s20, 0
      %p265 = por %p263, %p264
      %p266 = scmp.ne.s32.totalorder %s258, %s260
      %p267 = scmp.eq.s32.totalorder %s25, 1
      %p268 = por %p266, %p267
      %p269 = scmp.ne.s32.totalorder %s260, %s261
      %p270 = scmp.eq.s32.totalorder %s25, 0
      %p271 = por %p269, %p270
      %p272 = scmp.ne.s32.totalorder %s260, %s261
      %p273 = scmp.eq.s32.totalorder %s26, 1
      %p274 = por %p272, %p273
      %p276 = scmp.ne.s32.totalorder %s261, %s275
      %p277 = scmp.eq.s32.totalorder %s26, 0
      %p278 = por %p276, %p277
      %s279 = ssub.s32 %s20, %s27
      %p280 = scmp.eq.s32.totalorder %s279, 0
      %s282 = sadd.s32 %s281, 1
      %s283 = scalar_select %p280, %s281, %s282
      %p286 = pneg %p280
      %p287 = scmp.eq.s32.totalorder %s20, 1
      %p288 = por %p286, %p287
      %p289 = scmp.ne.s32.totalorder %s281, %s284
      %p290 = scmp.eq.s32.totalorder %s20, 0
      %p291 = por %p289, %p290
      %p292 = scmp.ne.s32.totalorder %s281, %s284
      %p293 = scmp.eq.s32.totalorder %s25, 1
      %p294 = por %p292, %p293
      %p295 = scmp.ne.s32.totalorder %s284, %s285
      %p296 = scmp.eq.s32.totalorder %s25, 0
      %p297 = por %p295, %p296
      %p298 = scmp.ne.s32.totalorder %s284, %s285
      %p299 = scmp.eq.s32.totalorder %s26, 1
      %p300 = por %p298, %p299
      %p302 = scmp.ne.s32.totalorder %s285, %s301
      %p303 = scmp.eq.s32.totalorder %s26, 0
      %p304 = por %p302, %p303
      %p305 = scmp.le.s32.totalorder 1, %s20
      %p306 = scmp.lt.s32.totalorder %s20, 3
      %p307 = pnand %p305, %p306
      %p308 = pneg %p307
      // Predicated region
      $region9: #{tpu_custom_call.1} parent=5 // pred_check
        _
      $region10: #{tpu_custom_call.1} parent=5 // pred_check_branch
        %310 = sbr.rel (%p307) target = $region12
      $region11: #{tpu_custom_call.1} parent=5 // pred_region
        %s311 = ssub.s32 %s20, 1
        // Predicated region
        $region13: #{tpu_custom_call.1} parent=11 // pred_check
          %p312 = pneg %p93
        $region14: #{tpu_custom_call.1} parent=11 // pred_check_branch
          %314 = sbr.rel (%p312) target = $region16
        $region15: #{tpu_custom_call.1} parent=11 // pred_region
          _
        $region16: #{tpu_custom_call.1} parent=11 // pred_fallthru
          _
        // Predicated region
        $region17: #{tpu_custom_call.1} parent=11 // pred_check
          %p315 = pneg %p114
        $region18: #{tpu_custom_call.1} parent=11 // pred_check_branch
          %317 = sbr.rel (%p315) target = $region20
        $region19: #{tpu_custom_call.1} parent=11 // pred_region
          _
        $region20: #{tpu_custom_call.1} parent=11 // pred_fallthru
          _
        // Predicated region
        $region21: #{tpu_custom_call.1} parent=11 // pred_check
          %p318 = pneg %p135
        $region22: #{tpu_custom_call.1} parent=11 // pred_check_branch
          %320 = sbr.rel (%p318) target = $region24
        $region23: #{tpu_custom_call.1} parent=11 // pred_region
          _
        $region24: #{tpu_custom_call.1} parent=11 // pred_fallthru
          _
        // Predicated region
        $region25: #{tpu_custom_call.1} parent=11 // pred_check
          %p321 = pneg %p156
        $region26: #{tpu_custom_call.1} parent=11 // pred_check_branch
          %323 = sbr.rel (%p321) target = $region28
        $region27: #{tpu_custom_call.1} parent=11 // pred_region
          _
        $region28: #{tpu_custom_call.1} parent=11 // pred_fallthru
          _
        // Predicated region
        $region29: #{tpu_custom_call.1} parent=11 // pred_check
          %p324 = pneg %p229
        $region30: #{tpu_custom_call.1} parent=11 // pred_check_branch
          %326 = sbr.rel (%p324) target = $region32
        $region31: #{tpu_custom_call.1} parent=11 // pred_region
          _
        $region32: #{tpu_custom_call.1} parent=11 // pred_fallthru
          _
        // Predicated region
        $region33: #{tpu_custom_call.1} parent=11 // pred_check
          %p327 = pneg %p250
        $region34: #{tpu_custom_call.1} parent=11 // pred_check_branch
          %329 = sbr.rel (%p327) target = $region36
        $region35: #{tpu_custom_call.1} parent=11 // pred_region
          _
        $region36: #{tpu_custom_call.1} parent=11 // pred_fallthru
          _
        // Predicated region
        $region37: #{tpu_custom_call.1} parent=11 // pred_check
          %p330 = pneg %p271
        $region38: #{tpu_custom_call.1} parent=11 // pred_check_branch
          %332 = sbr.rel (%p330) target = $region40
        $region39: #{tpu_custom_call.1} parent=11 // pred_region
          _
        $region40: #{tpu_custom_call.1} parent=11 // pred_fallthru
          _
      $region12: #{tpu_custom_call.1} parent=5 // pred_fallthru
        _
      %p333 = scmp.lt.s32.totalorder %s20, 2
      // Predicated region
      $region41: #{tpu_custom_call.1} parent=5 // pred_check
        %p334 = pneg %p333
      $region42: #{tpu_custom_call.1} parent=5 // pred_check_branch
        %336 = sbr.rel (%p334) target = $region44
      $region43: #{tpu_custom_call.1} parent=5 // pred_region
        // Predicated region
        $region45: #{tpu_custom_call.1} parent=43 // pred_check
          %p337 = pneg %p40
        $region46: #{tpu_custom_call.1} parent=43 // pred_check_branch
          %339 = sbr.rel (%p337) target = $region48
        $region47: #{tpu_custom_call.1} parent=43 // pred_region
          %p340 = scmp.lt.s32.totalorder %s20, 1
          %s341 = scalar_select %p340, %s20, 1
          %s342 = smul.addr %s341, 4
          %s343 = smul.addr %s342, 8
          %s344 = scalar_lea.vmem %s0, %s343
        $region48: #{tpu_custom_call.1} parent=43 // pred_fallthru
          _
        // Predicated region
        $region49: #{tpu_custom_call.1} parent=43 // pred_check
          %p345 = pneg %p66
        $region50: #{tpu_custom_call.1} parent=43 // pred_check_branch
          %347 = sbr.rel (%p345) target = $region52
        $region51: #{tpu_custom_call.1} parent=43 // pred_region
          %p348 = scmp.lt.s32.totalorder %s20, 1
          %s349 = scalar_select %p348, %s20, 1
          %s350 = smul.addr %s349, 8
          %s351 = smul.addr %s350, 8
          %s352 = scalar_lea.vmem %s1, %s351
        $region52: #{tpu_custom_call.1} parent=43 // pred_fallthru
          _
        // Predicated region
        $region53: #{tpu_custom_call.1} parent=43 // pred_check
          %p353 = pneg %p176
        $region54: #{tpu_custom_call.1} parent=43 // pred_check_branch
          %355 = sbr.rel (%p353) target = $region56
        $region55: #{tpu_custom_call.1} parent=43 // pred_region
          %p356 = scmp.lt.s32.totalorder %s20, 1
          %s357 = scalar_select %p356, %s20, 1
          %s358 = smul.addr %s357, 2
          %s359 = scalar_lea.vmem %s6, %s358
        $region56: #{tpu_custom_call.1} parent=43 // pred_fallthru
          _
        // Predicated region
        $region57: #{tpu_custom_call.1} parent=43 // pred_check
          %p360 = pneg %p202
        $region58: #{tpu_custom_call.1} parent=43 // pred_check_branch
          %362 = sbr.rel (%p360) target = $region60
        $region59: #{tpu_custom_call.1} parent=43 // pred_region
          %p363 = scmp.lt.s32.totalorder %s20, 1
          %s364 = scalar_select %p363, %s20, 1
          %s365 = smul.addr %s364, 2
          %s366 = scalar_lea.vmem %s7, %s365
        $region60: #{tpu_custom_call.1} parent=43 // pred_fallthru
          _
      $region44: #{tpu_custom_call.1} parent=5 // pred_fallthru
        _
      %p367 = scmp.le.s32.totalorder 1, %s20
      %p368 = scmp.lt.s32.totalorder %s20, 3
      %p369 = pnand %p367, %p368
      %p370 = pneg %p369
      // Predicated region
      $region61: #{tpu_custom_call.1} parent=5 // pred_check
        _
      $region62: #{tpu_custom_call.1} parent=5 // pred_check_branch
        %372 = sbr.rel (%p369) target = $region64
      $region63: #{tpu_custom_call.1} parent=5 // pred_region
        %s373 = ssub.s32 %s20, 1
        %p374 = scmp.lt.s32.totalorder %s25, 1
        %s375 = scalar_select %p374, %s25, 1
        %s376 = smul.addr %s375, 4
        %s377 = smul.addr %s376, 8
        %s378 = scalar_lea.vmem %s0, %s377
        %p379 = pneg %p46
        %p380 = pneg %p43
        %p381 = scmp.lt.s32.totalorder %s25, 1
        %s382 = scalar_select %p381, %s25, 1
        %s383 = smul.addr %s382, 8
        %s384 = smul.addr %s383, 8
        %s385 = scalar_lea.vmem %s1, %s384
        %p386 = pneg %p72
        %p387 = pneg %p69
        %p388 = pneg %p93
        %p389 = pneg %p90
        %p390 = pneg %p114
        %p391 = pneg %p111
        %p392 = pneg %p135
        %p393 = pneg %p132
        %p394 = pneg %p156
        %p395 = pneg %p153
        %p396 = scmp.lt.s32.totalorder %s25, 1
        %s397 = scalar_select %p396, %s25, 1
        %s398 = smul.addr %s397, 2
        %s399 = scalar_lea.vmem %s6, %s398
        %p400 = pneg %p182
        %p401 = pneg %p179
        %p402 = scmp.lt.s32.totalorder %s25, 1
        %s403 = scalar_select %p402, %s25, 1
        %s404 = smul.addr %s403, 2
        %s405 = scalar_lea.vmem %s7, %s404
        %p406 = pneg %p208
        %p407 = pneg %p205
        %p408 = pneg %p229
        %p409 = pneg %p226
        %p410 = pneg %p250
        %p411 = pneg %p247
        %p412 = pneg %p271
        %p413 = pneg %p268
        %p414 = pneg %p297
        %p415 = pneg %p294
        %s416 = sand.u32 %s284, 1
        %s417 = scalar_lea.sflag [#allocation3], %s416
        %s418 = sand.u32 %s284, 1
        %s419 = smul.addr %s418, 64
        %s420 = scalar_lea.vmem [#allocation2], %s419
        %p421 = scmp.lt.s32.totalorder %s25, 1
        %s422 = scalar_select %p421, %s25, 1
        %s423 = smul.addr %s422, 4
        %s424 = smul.addr %s423, 8
        %s425 = scalar_lea.vmem %s0, %s424
        %p426 = scmp.lt.s32.totalorder %s25, 1
        %s427 = scalar_select %p426, %s25, 1
        %s428 = smul.addr %s427, 8
        %s429 = smul.addr %s428, 8
        %s430 = scalar_lea.vmem %s1, %s429
        %p431 = scmp.lt.s32.totalorder %s25, 1
        %s432 = scalar_select %p431, %s25, 1
        %s433 = smul.addr %s432, 2
        %s434 = scalar_lea.vmem %s6, %s433
        %p435 = scmp.lt.s32.totalorder %s25, 1
        %s436 = scalar_select %p435, %s25, 1
        %s437 = smul.addr %s436, 2
        %s438 = scalar_lea.vmem %s7, %s437
        %v439 = vld [vmem:[%s2] sm:$0xff]
        %v440 = vld [vmem:[%s2 + $0x8] sm:$0xff]
        %v441 = vld [vmem:[%s2 + $0x10] sm:$0xff]
        %v442 = vld [vmem:[%s2 + $0x18] sm:$0xff]
        %v443 = vld [vmem:[%s2 + $0x20] sm:$0xff]
        %v444 = vld [vmem:[%s2 + $0x28] sm:$0xff]
        %v445 = vld [vmem:[%s2 + $0x30] sm:$0xff]
        %v446 = vld [vmem:[%s2 + $0x38] sm:$0xff]
        %v447 = vld [vmem:[%s2 + $0x40] sm:$0xff]
        %v448 = vld [vmem:[%s2 + $0x48] sm:$0xff]
        %v449 = vld [vmem:[%s2 + $0x50] sm:$0xff]
        %v450 = vld [vmem:[%s2 + $0x58] sm:$0xff]
        %v451 = vld [vmem:[%s2 + $0x60] sm:$0xff]
        %v452 = vld [vmem:[%s2 + $0x68] sm:$0xff]
        %v453 = vld [vmem:[%s2 + $0x70] sm:$0xff]
        %v454 = vld [vmem:[%s2 + $0x78] sm:$0xff]
        %v455 = vld [vmem:[%s430] sm:$0xff]
        %v456 = vld [vmem:[%s430 + $0x8] sm:$0xff]
        %v457 = vld [vmem:[%s430 + $0x10] sm:$0xff]
        %v458 = vld [vmem:[%s430 + $0x18] sm:$0xff]
        %v459 = vld [vmem:[%s430 + $0x20] sm:$0xff]
        %v460 = vld [vmem:[%s430 + $0x28] sm:$0xff]
        %v461 = vld [vmem:[%s430 + $0x30] sm:$0xff]
        %v462 = vld [vmem:[%s430 + $0x38] sm:$0xff]
        %v463 = vld [vmem:[%s3] sm:$0xff]
        %v464 = vld [vmem:[%s3 + $0x8] sm:$0xff]
        %v465 = vld [vmem:[%s3 + $0x10] sm:$0xff]
        %v466 = vld [vmem:[%s3 + $0x18] sm:$0xff]
        %v467 = vld [vmem:[%s3 + $0x20] sm:$0xff]
        %v468 = vld [vmem:[%s3 + $0x28] sm:$0xff]
        %v469 = vld [vmem:[%s3 + $0x30] sm:$0xff]
        %v470 = vld [vmem:[%s3 + $0x38] sm:$0xff]
        %v471 = vld [vmem:[%s3 + $0x40] sm:$0xff]
        %v472 = vld [vmem:[%s3 + $0x48] sm:$0xff]
        %v473 = vld [vmem:[%s3 + $0x50] sm:$0xff]
        %v474 = vld [vmem:[%s3 + $0x58] sm:$0xff]
        %v475 = vld [vmem:[%s3 + $0x60] sm:$0xff]
        %v476 = vld [vmem:[%s3 + $0x68] sm:$0xff]
        %v477 = vld [vmem:[%s3 + $0x70] sm:$0xff]
        %v478 = vld [vmem:[%s3 + $0x78] sm:$0xff]
        %vm479 = vcmask 523264
        %v481 = vsel %vm479, %v439, 0
        %v484 = vsel %vm479, %v440, 0
        %v487 = vsel %vm479, %v441, 0
        %v490 = vsel %vm479, %v442, 0
        %v493 = vsel %vm479, %v443, 0
        %v496 = vsel %vm479, %v444, 0
        %v499 = vsel %vm479, %v445, 0
        %v502 = vsel %vm479, %v446, 0
        %v505 = vsel %vm479, %v447, 0
        %v508 = vsel %vm479, %v448, 0
        %v511 = vsel %vm479, %v449, 0
        %v514 = vsel %vm479, %v450, 0
        %v517 = vsel %vm479, %v451, 0
        %v520 = vsel %vm479, %v452, 0
        %v523 = vsel %vm479, %v453, 0
        %v526 = vsel %vm479, %v454, 0
        %528 = vmatpush.msra.mxu0 0.0
        %529 = vmatpush.msra.mxu0 0.0
        %530 = vmatpush.msra.mxu0 0.0
        %531 = vmatpush.msra.mxu0 0.0
        %532 = vmatpush.msra.mxu0 0.0
        %533 = vmatpush.msra.mxu0 0.0
        %534 = vmatpush.msra.mxu0 0.0
        %535 = vmatpush.msra.mxu0 0.0
        %536 = vmatpush.msra.mxu0 %v462
        %537 = vmatpush.msra.mxu0 %v461
        %538 = vmatpush.msra.mxu0 %v460
        %539 = vmatpush.msra.mxu0 %v459
        %540 = vmatpush.msra.mxu0 %v458
        %541 = vmatpush.msra.mxu0 %v457
        %542 = vmatpush.msra.mxu0 %v456
        %543 = vmatpush.msra.mxu0 %v455
        %544 = vmatmul.f32.gmra.mxu0 %v481
        %v545 = vpop.f32.mrf.mxu0
        %v546 = vadd.f32 %v463, %v545
        %547 = vmatmul.f32.gmra.mxu0 %v484
        %v548 = vpop.f32.mrf.mxu0
        %v549 = vadd.f32 %v464, %v548
        %550 = vmatmul.f32.gmra.mxu0 %v487
        %v551 = vpop.f32.mrf.mxu0
        %v552 = vadd.f32 %v465, %v551
        %553 = vmatmul.f32.gmra.mxu0 %v490
        %v554 = vpop.f32.mrf.mxu0
        %v555 = vadd.f32 %v466, %v554
        %556 = vmatmul.f32.gmra.mxu0 %v493
        %v557 = vpop.f32.mrf.mxu0
        %v558 = vadd.f32 %v467, %v557
        %559 = vmatmul.f32.gmra.mxu0 %v496
        %v560 = vpop.f32.mrf.mxu0
        %v561 = vadd.f32 %v468, %v560
        %562 = vmatmul.f32.gmra.mxu0 %v499
        %v563 = vpop.f32.mrf.mxu0
        %v564 = vadd.f32 %v469, %v563
        %565 = vmatmul.f32.gmra.mxu0 %v502
        %v566 = vpop.f32.mrf.mxu0
        %v567 = vadd.f32 %v470, %v566
        %568 = vmatmul.f32.gmra.mxu0 %v505
        %v569 = vpop.f32.mrf.mxu0
        %v570 = vadd.f32 %v471, %v569
        %571 = vmatmul.f32.gmra.mxu0 %v508
        %v572 = vpop.f32.mrf.mxu0
        %v573 = vadd.f32 %v472, %v572
        %574 = vmatmul.f32.gmra.mxu0 %v511
        %v575 = vpop.f32.mrf.mxu0
        %v576 = vadd.f32 %v473, %v575
        %577 = vmatmul.f32.gmra.mxu0 %v514
        %v578 = vpop.f32.mrf.mxu0
        %v579 = vadd.f32 %v474, %v578
        %580 = vmatmul.f32.gmra.mxu0 %v517
        %v581 = vpop.f32.mrf.mxu0
        %v582 = vadd.f32 %v475, %v581
        %583 = vmatmul.f32.gmra.mxu0 %v520
        %v584 = vpop.f32.mrf.mxu0
        %v585 = vadd.f32 %v476, %v584
        %586 = vmatmul.f32.gmra.mxu0 %v523
        %v587 = vpop.f32.mrf.mxu0
        %v588 = vadd.f32 %v477, %v587
        %589 = vmatmul.f32.gmra.mxu0 %v526
        %v590 = vpop.f32.mrf.mxu0
        %v591 = vadd.f32 %v478, %v590
        %592 = vdwg.mxu0
        %vm593 = vcmp.ge.f32.partialorder %v546, 0.0
        %vm594 = vcmp.ge.f32.partialorder %v549, 0.0
        %vm595 = vcmp.ge.f32.partialorder %v552, 0.0
        %vm596 = vcmp.ge.f32.partialorder %v555, 0.0
        %vm597 = vcmp.ge.f32.partialorder %v558, 0.0
        %vm598 = vcmp.ge.f32.partialorder %v561, 0.0
        %vm599 = vcmp.ge.f32.partialorder %v564, 0.0
        %vm600 = vcmp.ge.f32.partialorder %v567, 0.0
        %vm601 = vcmp.ge.f32.partialorder %v570, 0.0
        %vm602 = vcmp.ge.f32.partialorder %v573, 0.0
        %vm603 = vcmp.ge.f32.partialorder %v576, 0.0
        %vm604 = vcmp.ge.f32.partialorder %v579, 0.0
        %vm605 = vcmp.ge.f32.partialorder %v582, 0.0
        %vm606 = vcmp.ge.f32.partialorder %v585, 0.0
        %vm607 = vcmp.ge.f32.partialorder %v588, 0.0
        %vm608 = vcmp.ge.f32.partialorder %v591, 0.0
        %v609 = vmul.f32 %v546, 0.2
        %v610 = vmul.f32 %v549, 0.2
        %v611 = vmul.f32 %v552, 0.2
        %v612 = vmul.f32 %v555, 0.2
        %v613 = vmul.f32 %v558, 0.2
        %v614 = vmul.f32 %v561, 0.2
        %v615 = vmul.f32 %v564, 0.2
        %v616 = vmul.f32 %v567, 0.2
        %v617 = vmul.f32 %v570, 0.2
        %v618 = vmul.f32 %v573, 0.2
        %v619 = vmul.f32 %v576, 0.2
        %v620 = vmul.f32 %v579, 0.2
        %v621 = vmul.f32 %v582, 0.2
        %v622 = vmul.f32 %v585, 0.2
        %v623 = vmul.f32 %v588, 0.2
        %v624 = vmul.f32 %v591, 0.2
        %v625 = vsel %vm593, %v546, %v609
        %v626 = vsel %vm594, %v549, %v610
        %v627 = vsel %vm595, %v552, %v611
        %v628 = vsel %vm596, %v555, %v612
        %v629 = vsel %vm597, %v558, %v613
        %v630 = vsel %vm598, %v561, %v614
        %v631 = vsel %vm599, %v564, %v615
        %v632 = vsel %vm600, %v567, %v616
        %v633 = vsel %vm601, %v570, %v617
        %v634 = vsel %vm602, %v573, %v618
        %v635 = vsel %vm603, %v576, %v619
        %v636 = vsel %vm604, %v579, %v620
        %v637 = vsel %vm605, %v582, %v621
        %v638 = vsel %vm606, %v585, %v622
        %v639 = vsel %vm607, %v588, %v623
        %v640 = vsel %vm608, %v591, %v624
        %v641 = vld [vmem:[%s8] sm:$0xff]
        %v642 = vld [vmem:[%s8 + $0x8] sm:$0xff]
        %v643 = vld [vmem:[%s8 + $0x10] sm:$0xff]
        %v644 = vld [vmem:[%s8 + $0x18] sm:$0xff]
        %v645 = vld [vmem:[%s425] sm:$0xff]
        %v646 = vld [vmem:[%s425 + $0x8] sm:$0xff]
        %v647 = vld [vmem:[%s425 + $0x10] sm:$0xff]
        %v648 = vld [vmem:[%s425 + $0x18] sm:$0xff]
        %v649 = vld [vmem:[%s4] sm:$0xff]
        %v650 = vld [vmem:[%s4 + $0x8] sm:$0xff]
        %v651 = vld [vmem:[%s4 + $0x10] sm:$0xff]
        %v652 = vld [vmem:[%s4 + $0x18] sm:$0xff]
        %v653 = vld [vmem:[%s4 + $0x20] sm:$0xff]
        %v654 = vld [vmem:[%s4 + $0x28] sm:$0xff]
        %v655 = vld [vmem:[%s4 + $0x30] sm:$0xff]
        %v656 = vld [vmem:[%s4 + $0x38] sm:$0xff]
        %v657 = vld [vmem:[%s4 + $0x40] sm:$0xff]
        %v658 = vld [vmem:[%s4 + $0x48] sm:$0xff]
        %v659 = vld [vmem:[%s4 + $0x50] sm:$0xff]
        %v660 = vld [vmem:[%s4 + $0x58] sm:$0xff]
        %v661 = vld [vmem:[%s4 + $0x60] sm:$0xff]
        %v662 = vld [vmem:[%s4 + $0x68] sm:$0xff]
        %v663 = vld [vmem:[%s4 + $0x70] sm:$0xff]
        %v664 = vld [vmem:[%s4 + $0x78] sm:$0xff]
        %v665 = vld [vmem:[%s434] sm:$0x3]
        %667 = vset.pattern.permute.xlu0 0
        %668 = vperm.xlu0 %667, %v641
        %v669 = vpop.permute.xlu0 %668
        %672 = vset.pattern.permute.xlu0 0
        %673 = vperm.xlu0 %672, %v642
        %v674 = vpop.permute.xlu0 %673
        %677 = vset.pattern.permute.xlu0 0
        %678 = vperm.xlu0 %677, %v643
        %v679 = vpop.permute.xlu0 %678
        %682 = vset.pattern.permute.xlu0 0
        %683 = vperm.xlu0 %682, %v644
        %v684 = vpop.permute.xlu0 %683
        %v687 = vperm.slane %v665, 0
        %v688 = vperm.slane %v665, 1
        %v691 = vmul.f32 %v669, %v687
        %v692 = vmul.f32 %v669, %v688
        %v693 = vmul.f32 %v674, %v687
        %v694 = vmul.f32 %v674, %v688
        %v695 = vmul.f32 %v679, %v687
        %v696 = vmul.f32 %v679, %v688
        %v697 = vmul.f32 %v684, %v687
        %v698 = vmul.f32 %v684, %v688
        %v700 = vsel %vm479, %v645, 0
        %v703 = vsel %vm479, %v646, 0
        %v706 = vsel %vm479, %v647, 0
        %v709 = vsel %vm479, %v648, 0
        %711 = vmatpush.msra.mxu0 0.0
        %712 = vmatpush.msra.mxu0 0.0
        %713 = vmatpush.msra.mxu0 0.0
        %714 = vmatpush.msra.mxu0 0.0
        %715 = vmatpush.msra.mxu0 0.0
        %716 = vmatpush.msra.mxu0 0.0
        %717 = vmatpush.msra.mxu0 0.0
        %718 = vmatpush.msra.mxu0 0.0
        %719 = vmatpush.msra.mxu0 %v663
        %720 = vmatpush.msra.mxu0 %v661
        %721 = vmatpush.msra.mxu0 %v659
        %722 = vmatpush.msra.mxu0 %v657
        %723 = vmatpush.msra.mxu0 %v655
        %724 = vmatpush.msra.mxu0 %v653
        %725 = vmatpush.msra.mxu0 %v651
        %726 = vmatpush.msra.mxu0 %v649
        %727 = vmatmul.f32.gmra.mxu0 %v700
        %v728 = vpop.f32.mrf.mxu0
        %v729 = vadd.f32 %v691, %v728
        %730 = vmatmul.f32.gmra.mxu0 %v703
        %v731 = vpop.f32.mrf.mxu0
        %v732 = vadd.f32 %v693, %v731
        %733 = vmatmul.f32.gmra.mxu0 %v706
        %v734 = vpop.f32.mrf.mxu0
        %v735 = vadd.f32 %v695, %v734
        %736 = vmatmul.f32.gmra.mxu0 %v709
        %v737 = vpop.f32.mrf.mxu0
        %v738 = vadd.f32 %v697, %v737
        %739 = vdwg.mxu0
        %740 = vmatpush.msra.mxu0 0.0
        %741 = vmatpush.msra.mxu0 0.0
        %742 = vmatpush.msra.mxu0 0.0
        %743 = vmatpush.msra.mxu0 0.0
        %744 = vmatpush.msra.mxu0 0.0
        %745 = vmatpush.msra.mxu0 0.0
        %746 = vmatpush.msra.mxu0 0.0
        %747 = vmatpush.msra.mxu0 0.0
        %748 = vmatpush.msra.mxu0 %v664
        %749 = vmatpush.msra.mxu0 %v662
        %750 = vmatpush.msra.mxu0 %v660
        %751 = vmatpush.msra.mxu0 %v658
        %752 = vmatpush.msra.mxu0 %v656
        %753 = vmatpush.msra.mxu0 %v654
        %754 = vmatpush.msra.mxu0 %v652
        %755 = vmatpush.msra.mxu0 %v650
        %756 = vmatmul.f32.gmra.mxu0 %v700
        %v757 = vpop.f32.mrf.mxu0
        %v758 = vadd.f32 %v692, %v757
        %759 = vmatmul.f32.gmra.mxu0 %v703
        %v760 = vpop.f32.mrf.mxu0
        %v761 = vadd.f32 %v694, %v760
        %762 = vmatmul.f32.gmra.mxu0 %v706
        %v763 = vpop.f32.mrf.mxu0
        %v764 = vadd.f32 %v696, %v763
        %765 = vmatmul.f32.gmra.mxu0 %v709
        %v766 = vpop.f32.mrf.mxu0
        %v767 = vadd.f32 %v698, %v766
        %768 = vdwg.mxu0
        %vm769 = vcmp.ge.f32.partialorder %v729, 0.0
        %vm770 = vcmp.ge.f32.partialorder %v758, 0.0
        %vm771 = vcmp.ge.f32.partialorder %v732, 0.0
        %vm772 = vcmp.ge.f32.partialorder %v761, 0.0
        %vm773 = vcmp.ge.f32.partialorder %v735, 0.0
        %vm774 = vcmp.ge.f32.partialorder %v764, 0.0
        %vm775 = vcmp.ge.f32.partialorder %v738, 0.0
        %vm776 = vcmp.ge.f32.partialorder %v767, 0.0
        %v777 = vmul.f32 %v729, 0.2
        %v778 = vmul.f32 %v758, 0.2
        %v779 = vmul.f32 %v732, 0.2
        %v780 = vmul.f32 %v761, 0.2
        %v781 = vmul.f32 %v735, 0.2
        %v782 = vmul.f32 %v764, 0.2
        %v783 = vmul.f32 %v738, 0.2
        %v784 = vmul.f32 %v767, 0.2
        %v785 = vsel %vm769, %v729, %v777
        %v786 = vsel %vm770, %v758, %v778
        %v787 = vsel %vm771, %v732, %v779
        %v788 = vsel %vm772, %v761, %v780
        %v789 = vsel %vm773, %v735, %v781
        %v790 = vsel %vm774, %v764, %v782
        %v791 = vsel %vm775, %v738, %v783
        %v792 = vsel %vm776, %v767, %v784
        %v793 = vadd.f32 %v785, %v786
        %794 = vadd.xlane.f32.xlu0 %v793
        %v795 = vpop.xlane.xlu0 %794
        %v796 = vadd.f32 %v787, %v788
        %797 = vadd.xlane.f32.xlu0 %v796
        %v798 = vpop.xlane.xlu0 %797
        %v799 = vadd.f32 %v789, %v790
        %800 = vadd.xlane.f32.xlu0 %v799
        %v801 = vpop.xlane.xlu0 %800
        %v802 = vadd.f32 %v791, %v792
        %803 = vadd.xlane.f32.xlu0 %v802
        %v804 = vpop.xlane.xlu0 %803
        %v805 = vmul.f32 %v795, 0.00390625
        %v806 = vmul.f32 %v798, 0.00390625
        %v807 = vmul.f32 %v801, 0.00390625
        %v808 = vmul.f32 %v804, 0.00390625
        %v809 = vsub.f32 %v785, %v805
        %v810 = vsub.f32 %v786, %v805
        %v811 = vsub.f32 %v787, %v806
        %v812 = vsub.f32 %v788, %v806
        %v813 = vsub.f32 %v789, %v807
        %v814 = vsub.f32 %v790, %v807
        %v815 = vsub.f32 %v791, %v808
        %v816 = vsub.f32 %v792, %v808
        %v817 = vmul.f32 %v809, %v809
        %v818 = vmul.f32 %v810, %v810
        %v819 = vmul.f32 %v811, %v811
        %v820 = vmul.f32 %v812, %v812
        %v821 = vmul.f32 %v813, %v813
        %v822 = vmul.f32 %v814, %v814
        %v823 = vmul.f32 %v815, %v815
        %v824 = vmul.f32 %v816, %v816
        %v825 = vadd.f32 %v817, %v818
        %826 = vadd.xlane.f32.xlu0 %v825
        %v827 = vpop.xlane.xlu0 %826
        %v828 = vadd.f32 %v819, %v820
        %829 = vadd.xlane.f32.xlu0 %v828
        %v830 = vpop.xlane.xlu0 %829
        %v831 = vadd.f32 %v821, %v822
        %832 = vadd.xlane.f32.xlu0 %v831
        %v833 = vpop.xlane.xlu0 %832
        %v834 = vadd.f32 %v823, %v824
        %835 = vadd.xlane.f32.xlu0 %v834
        %v836 = vpop.xlane.xlu0 %835
        %v837 = vmul.f32 %v827, 0.00390625
        %v838 = vmul.f32 %v830, 0.00390625
        %v839 = vmul.f32 %v833, 0.00390625
        %v840 = vmul.f32 %v836, 0.00390625
        %v841 = vadd.f32 %v837, 1e-08
        %v842 = vadd.f32 %v838, 1e-08
        %v843 = vadd.f32 %v839, 1e-08
        %v844 = vadd.f32 %v840, 1e-08
        %v845 = vrsqrt.pop %v841
        %v846 = vmul.f32 %v845, %v841
        %v847 = vmul.f32 %v846, %v845
        %v848 = vmul.f32 0.5, %v847
        %v849 = vsub.f32 1.5, %v848
        %v850 = vmul.f32 %v845, %v849
        %vm851 = vweird.f32 %v841
        %vm852 = vweird.f32 %v845
        %vm853 = vmor %vm851, %vm852
        %v854 = vsel %vm853, %v845, %v850
        %v855 = vrsqrt.pop %v842
        %v856 = vmul.f32 %v855, %v842
        %v857 = vmul.f32 %v856, %v855
        %v858 = vmul.f32 0.5, %v857
        %v859 = vsub.f32 1.5, %v858
        %v860 = vmul.f32 %v855, %v859
        %vm861 = vweird.f32 %v842
        %vm862 = vweird.f32 %v855
        %vm863 = vmor %vm861, %vm862
        %v864 = vsel %vm863, %v855, %v860
        %v865 = vrsqrt.pop %v843
        %v866 = vmul.f32 %v865, %v843
        %v867 = vmul.f32 %v866, %v865
        %v868 = vmul.f32 0.5, %v867
        %v869 = vsub.f32 1.5, %v868
        %v870 = vmul.f32 %v865, %v869
        %vm871 = vweird.f32 %v843
        %vm872 = vweird.f32 %v865
        %vm873 = vmor %vm871, %vm872
        %v874 = vsel %vm873, %v865, %v870
        %v875 = vrsqrt.pop %v844
        %v876 = vmul.f32 %v875, %v844
        %v877 = vmul.f32 %v876, %v875
        %v878 = vmul.f32 0.5, %v877
        %v879 = vsub.f32 1.5, %v878
        %v880 = vmul.f32 %v875, %v879
        %vm881 = vweird.f32 %v844
        %vm882 = vweird.f32 %v875
        %vm883 = vmor %vm881, %vm882
        %v884 = vsel %vm883, %v875, %v880
        %v885 = vmul.f32 %v809, %v854
        %v886 = vmul.f32 %v810, %v854
        %v887 = vmul.f32 %v811, %v864
        %v888 = vmul.f32 %v812, %v864
        %v889 = vmul.f32 %v813, %v874
        %v890 = vmul.f32 %v814, %v874
        %v891 = vmul.f32 %v815, %v884
        %v892 = vmul.f32 %v816, %v884
        %v893 = vadd.f32 %v625, 1.0
        %v894 = vadd.f32 %v626, 1.0
        %v895 = vadd.f32 %v627, 1.0
        %v896 = vadd.f32 %v628, 1.0
        %898 = vset.pattern.permute.xlu0 0
        %899 = vperm.xlu0 %898, %v893
        %v900 = vpop.permute.xlu0 %899
        %903 = vset.pattern.permute.xlu0 0
        %904 = vperm.xlu0 %903, %v894
        %v905 = vpop.permute.xlu0 %904
        %908 = vset.pattern.permute.xlu0 0
        %909 = vperm.xlu0 %908, %v895
        %v910 = vpop.permute.xlu0 %909
        %913 = vset.pattern.permute.xlu0 0
        %914 = vperm.xlu0 %913, %v896
        %v915 = vpop.permute.xlu0 %914
        %v917 = vmul.f32 %v885, %v900
        %v918 = vmul.f32 %v886, %v900
        %v919 = vmul.f32 %v887, %v905
        %v920 = vmul.f32 %v888, %v905
        %v921 = vmul.f32 %v889, %v910
        %v922 = vmul.f32 %v890, %v910
        %v923 = vmul.f32 %v891, %v915
        %v924 = vmul.f32 %v892, %v915
        %926 = vset.pattern.permute.xlu0 0
        %927 = vperm.xlu0 %926, %v629
        %v928 = vpop.permute.xlu0 %927
        %931 = vset.pattern.permute.xlu0 0
        %932 = vperm.xlu0 %931, %v630
        %v933 = vpop.permute.xlu0 %932
        %936 = vset.pattern.permute.xlu0 0
        %937 = vperm.xlu0 %936, %v631
        %v938 = vpop.permute.xlu0 %937
        %941 = vset.pattern.permute.xlu0 0
        %942 = vperm.xlu0 %941, %v632
        %v943 = vpop.permute.xlu0 %942
        %v945 = vadd.f32 %v917, %v928
        %v946 = vadd.f32 %v918, %v928
        %v947 = vadd.f32 %v919, %v933
        %v948 = vadd.f32 %v920, %v933
        %v949 = vadd.f32 %v921, %v938
        %v950 = vadd.f32 %v922, %v938
        %v951 = vadd.f32 %v923, %v943
        %v952 = vadd.f32 %v924, %v943
        %953 = vrot.lane.b32.xlu0 %v945, 17
        %v954 = vpop.permute.xlu0 %953
        %955 = vrot.lane.b32.xlu0 %v947, 17
        %v956 = vpop.permute.xlu0 %955
        %957 = vrot.lane.b32.xlu0 %v949, 17
        %v958 = vpop.permute.xlu0 %957
        %959 = vrot.lane.b32.xlu0 %v951, 17
        %v960 = vpop.permute.xlu0 %959
        %961 = vrot.lane.b32.xlu0 %v946, 17
        %v962 = vpop.permute.xlu0 %961
        %963 = vrot.lane.b32.xlu0 %v948, 17
        %v964 = vpop.permute.xlu0 %963
        %965 = vrot.lane.b32.xlu0 %v950, 17
        %v966 = vpop.permute.xlu0 %965
        %967 = vrot.lane.b32.xlu0 %v952, 17
        %v968 = vpop.permute.xlu0 %967
        %v969 = vlaneseq
        %v970 = vand.u32 %v969, 127
        %vm971 = vcmp.lt.s32.totalorder %v970, 17
        %v972 = vsel %vm971, %v954, %v962
        %v973 = vsel %vm971, %v956, %v964
        %v974 = vsel %vm971, %v958, %v966
        %v975 = vsel %vm971, %v960, %v968
        %v976 = vsel %vm971, %v962, %v954
        %v977 = vsel %vm971, %v964, %v956
        %v978 = vsel %vm971, %v966, %v958
        %v979 = vsel %vm971, %v968, %v960
        %v980 = vld [vmem:[%s5] ss:$8 sm:$0x3]
        %v982 = vperm.slane %v980, 0
        %v983 = vperm.slane %v980, 1
        %v986 = vmul.f32 %v976, %v982
        %v987 = vmul.f32 %v972, %v983
        %v988 = vmul.f32 %v977, %v982
        %v989 = vmul.f32 %v973, %v983
        %v990 = vmul.f32 %v978, %v982
        %v991 = vmul.f32 %v974, %v983
        %v992 = vmul.f32 %v979, %v982
        %v993 = vmul.f32 %v975, %v983
        %994 = vrot.lane.b32.xlu0 %v945, 16
        %v995 = vpop.permute.xlu0 %994
        %996 = vrot.lane.b32.xlu0 %v947, 16
        %v997 = vpop.permute.xlu0 %996
        %998 = vrot.lane.b32.xlu0 %v949, 16
        %v999 = vpop.permute.xlu0 %998
        %1000 = vrot.lane.b32.xlu0 %v951, 16
        %v1001 = vpop.permute.xlu0 %1000
        %1002 = vrot.lane.b32.xlu0 %v946, 16
        %v1003 = vpop.permute.xlu0 %1002
        %1004 = vrot.lane.b32.xlu0 %v948, 16
        %v1005 = vpop.permute.xlu0 %1004
        %1006 = vrot.lane.b32.xlu0 %v950, 16
        %v1007 = vpop.permute.xlu0 %1006
        %1008 = vrot.lane.b32.xlu0 %v952, 16
        %v1009 = vpop.permute.xlu0 %1008
        %vm1010 = vcmp.lt.s32.totalorder %v970, 16
        %v1011 = vsel %vm1010, %v995, %v1003
        %v1012 = vsel %vm1010, %v997, %v1005
        %v1013 = vsel %vm1010, %v999, %v1007
        %v1014 = vsel %vm1010, %v1001, %v1009
        %v1015 = vsel %vm1010, %v1003, %v995
        %v1016 = vsel %vm1010, %v1005, %v997
        %v1017 = vsel %vm1010, %v1007, %v999
        %v1018 = vsel %vm1010, %v1009, %v1001
        %s1019 = scalar_lea.vmem %s5, 1
        %v1020 = vld [vmem:[%s1019] ss:$8 sm:$0x3]
        %v1022 = vperm.slane %v1020, 0
        %v1023 = vperm.slane %v1020, 1
        %v1026 = vmul.f32 %v1015, %v1022
        %v1027 = vmul.f32 %v1011, %v1023
        %v1028 = vmul.f32 %v1016, %v1022
        %v1029 = vmul.f32 %v1012, %v1023
        %v1030 = vmul.f32 %v1017, %v1022
        %v1031 = vmul.f32 %v1013, %v1023
        %v1032 = vmul.f32 %v1018, %v1022
        %v1033 = vmul.f32 %v1014, %v1023
        %1034 = vrot.lane.b32.xlu0 %v945, 15
        %v1035 = vpop.permute.xlu0 %1034
        %1036 = vrot.lane.b32.xlu0 %v947, 15
        %v1037 = vpop.permute.xlu0 %1036
        %1038 = vrot.lane.b32.xlu0 %v949, 15
        %v1039 = vpop.permute.xlu0 %1038
        %1040 = vrot.lane.b32.xlu0 %v951, 15
        %v1041 = vpop.permute.xlu0 %1040
        %1042 = vrot.lane.b32.xlu0 %v946, 15
        %v1043 = vpop.permute.xlu0 %1042
        %1044 = vrot.lane.b32.xlu0 %v948, 15
        %v1045 = vpop.permute.xlu0 %1044
        %1046 = vrot.lane.b32.xlu0 %v950, 15
        %v1047 = vpop.permute.xlu0 %1046
        %1048 = vrot.lane.b32.xlu0 %v952, 15
        %v1049 = vpop.permute.xlu0 %1048
        %vm1050 = vcmp.lt.s32.totalorder %v970, 15
        %v1051 = vsel %vm1050, %v1035, %v1043
        %v1052 = vsel %vm1050, %v1037, %v1045
        %v1053 = vsel %vm1050, %v1039, %v1047
        %v1054 = vsel %vm1050, %v1041, %v1049
        %v1055 = vsel %vm1050, %v1043, %v1035
        %v1056 = vsel %vm1050, %v1045, %v1037
        %v1057 = vsel %vm1050, %v1047, %v1039
        %v1058 = vsel %vm1050, %v1049, %v1041
        %s1059 = scalar_lea.vmem %s5, 2
        %v1060 = vld [vmem:[%s1059] ss:$8 sm:$0x3]
        %v1062 = vperm.slane %v1060, 0
        %v1063 = vperm.slane %v1060, 1
        %v1066 = vmul.f32 %v1055, %v1062
        %v1067 = vmul.f32 %v1051, %v1063
        %v1068 = vmul.f32 %v1056, %v1062
        %v1069 = vmul.f32 %v1052, %v1063
        %v1070 = vmul.f32 %v1057, %v1062
        %v1071 = vmul.f32 %v1053, %v1063
        %v1072 = vmul.f32 %v1058, %v1062
        %v1073 = vmul.f32 %v1054, %v1063
        %1074 = vrot.lane.b32.xlu0 %v945, 1
        %v1075 = vpop.permute.xlu0 %1074
        %1076 = vrot.lane.b32.xlu0 %v947, 1
        %v1077 = vpop.permute.xlu0 %1076
        %1078 = vrot.lane.b32.xlu0 %v949, 1
        %v1079 = vpop.permute.xlu0 %1078
        %1080 = vrot.lane.b32.xlu0 %v951, 1
        %v1081 = vpop.permute.xlu0 %1080
        %1082 = vrot.lane.b32.xlu0 %v946, 1
        %v1083 = vpop.permute.xlu0 %1082
        %1084 = vrot.lane.b32.xlu0 %v948, 1
        %v1085 = vpop.permute.xlu0 %1084
        %1086 = vrot.lane.b32.xlu0 %v950, 1
        %v1087 = vpop.permute.xlu0 %1086
        %1088 = vrot.lane.b32.xlu0 %v952, 1
        %v1089 = vpop.permute.xlu0 %1088
        %vm1090 = vcmp.lt.s32.totalorder %v970, 1
        %v1091 = vsel %vm1090, %v1075, %v1083
        %v1092 = vsel %vm1090, %v1077, %v1085
        %v1093 = vsel %vm1090, %v1079, %v1087
        %v1094 = vsel %vm1090, %v1081, %v1089
        %v1095 = vsel %vm1090, %v1083, %v1075
        %v1096 = vsel %vm1090, %v1085, %v1077
        %v1097 = vsel %vm1090, %v1087, %v1079
        %v1098 = vsel %vm1090, %v1089, %v1081
        %s1099 = scalar_lea.vmem %s5, 3
        %v1100 = vld [vmem:[%s1099] ss:$8 sm:$0x3]
        %v1102 = vperm.slane %v1100, 0
        %v1103 = vperm.slane %v1100, 1
        %v1106 = vmul.f32 %v1095, %v1102
        %v1107 = vmul.f32 %v1091, %v1103
        %v1108 = vmul.f32 %v1096, %v1102
        %v1109 = vmul.f32 %v1092, %v1103
        %v1110 = vmul.f32 %v1097, %v1102
        %v1111 = vmul.f32 %v1093, %v1103
        %v1112 = vmul.f32 %v1098, %v1102
        %v1113 = vmul.f32 %v1094, %v1103
        %1114 = vrot.lane.b32.xlu0 %v945, 127
        %v1115 = vpop.permute.xlu0 %1114
        %1116 = vrot.lane.b32.xlu0 %v947, 127
        %v1117 = vpop.permute.xlu0 %1116
        %1118 = vrot.lane.b32.xlu0 %v949, 127
        %v1119 = vpop.permute.xlu0 %1118
        %1120 = vrot.lane.b32.xlu0 %v951, 127
        %v1121 = vpop.permute.xlu0 %1120
        %1122 = vrot.lane.b32.xlu0 %v946, 127
        %v1123 = vpop.permute.xlu0 %1122
        %1124 = vrot.lane.b32.xlu0 %v948, 127
        %v1125 = vpop.permute.xlu0 %1124
        %1126 = vrot.lane.b32.xlu0 %v950, 127
        %v1127 = vpop.permute.xlu0 %1126
        %1128 = vrot.lane.b32.xlu0 %v952, 127
        %v1129 = vpop.permute.xlu0 %1128
        %vm1130 = vcmp.lt.s32.totalorder %v970, 127
        %v1131 = vsel %vm1130, %v1115, %v1123
        %v1132 = vsel %vm1130, %v1117, %v1125
        %v1133 = vsel %vm1130, %v1119, %v1127
        %v1134 = vsel %vm1130, %v1121, %v1129
        %v1135 = vsel %vm1130, %v1123, %v1115
        %v1136 = vsel %vm1130, %v1125, %v1117
        %v1137 = vsel %vm1130, %v1127, %v1119
        %v1138 = vsel %vm1130, %v1129, %v1121
        %s1139 = scalar_lea.vmem %s5, 5
        %v1140 = vld [vmem:[%s1139] ss:$8 sm:$0x3]
        %v1142 = vperm.slane %v1140, 0
        %v1143 = vperm.slane %v1140, 1
        %v1146 = vmul.f32 %v1131, %v1142
        %v1147 = vmul.f32 %v1135, %v1143
        %v1148 = vmul.f32 %v1132, %v1142
        %v1149 = vmul.f32 %v1136, %v1143
        %v1150 = vmul.f32 %v1133, %v1142
        %v1151 = vmul.f32 %v1137, %v1143
        %v1152 = vmul.f32 %v1134, %v1142
        %v1153 = vmul.f32 %v1138, %v1143
        %1154 = vrot.lane.b32.xlu0 %v945, 113
        %v1155 = vpop.permute.xlu0 %1154
        %1156 = vrot.lane.b32.xlu0 %v947, 113
        %v1157 = vpop.permute.xlu0 %1156
        %1158 = vrot.lane.b32.xlu0 %v949, 113
        %v1159 = vpop.permute.xlu0 %1158
        %1160 = vrot.lane.b32.xlu0 %v951, 113
        %v1161 = vpop.permute.xlu0 %1160
        %1162 = vrot.lane.b32.xlu0 %v946, 113
        %v1163 = vpop.permute.xlu0 %1162
        %1164 = vrot.lane.b32.xlu0 %v948, 113
        %v1165 = vpop.permute.xlu0 %1164
        %1166 = vrot.lane.b32.xlu0 %v950, 113
        %v1167 = vpop.permute.xlu0 %1166
        %1168 = vrot.lane.b32.xlu0 %v952, 113
        %v1169 = vpop.permute.xlu0 %1168
        %vm1170 = vcmp.lt.s32.totalorder %v970, 113
        %v1171 = vsel %vm1170, %v1155, %v1163
        %v1172 = vsel %vm1170, %v1157, %v1165
        %v1173 = vsel %vm1170, %v1159, %v1167
        %v1174 = vsel %vm1170, %v1161, %v1169
        %v1175 = vsel %vm1170, %v1163, %v1155
        %v1176 = vsel %vm1170, %v1165, %v1157
        %v1177 = vsel %vm1170, %v1167, %v1159
        %v1178 = vsel %vm1170, %v1169, %v1161
        %s1179 = scalar_lea.vmem %s5, 6
        %v1180 = vld [vmem:[%s1179] ss:$8 sm:$0x3]
        %v1182 = vperm.slane %v1180, 0
        %v1183 = vperm.slane %v1180, 1
        %v1186 = vmul.f32 %v1171, %v1182
        %v1187 = vmul.f32 %v1175, %v1183
        %v1188 = vmul.f32 %v1172, %v1182
        %v1189 = vmul.f32 %v1176, %v1183
        %v1190 = vmul.f32 %v1173, %v1182
        %v1191 = vmul.f32 %v1177, %v1183
        %v1192 = vmul.f32 %v1174, %v1182
        %v1193 = vmul.f32 %v1178, %v1183
        %1194 = vrot.lane.b32.xlu0 %v945, 112
        %v1195 = vpop.permute.xlu0 %1194
        %1196 = vrot.lane.b32.xlu0 %v947, 112
        %v1197 = vpop.permute.xlu0 %1196
        %1198 = vrot.lane.b32.xlu0 %v949, 112
        %v1199 = vpop.permute.xlu0 %1198
        %1200 = vrot.lane.b32.xlu0 %v951, 112
        %v1201 = vpop.permute.xlu0 %1200
        %1202 = vrot.lane.b32.xlu0 %v946, 112
        %v1203 = vpop.permute.xlu0 %1202
        %1204 = vrot.lane.b32.xlu0 %v948, 112
        %v1205 = vpop.permute.xlu0 %1204
        %1206 = vrot.lane.b32.xlu0 %v950, 112
        %v1207 = vpop.permute.xlu0 %1206
        %1208 = vrot.lane.b32.xlu0 %v952, 112
        %v1209 = vpop.permute.xlu0 %1208
        %vm1210 = vcmp.lt.s32.totalorder %v970, 112
        %v1211 = vsel %vm1210, %v1195, %v1203
        %v1212 = vsel %vm1210, %v1197, %v1205
        %v1213 = vsel %vm1210, %v1199, %v1207
        %v1214 = vsel %vm1210, %v1201, %v1209
        %v1215 = vsel %vm1210, %v1203, %v1195
        %v1216 = vsel %vm1210, %v1205, %v1197
        %v1217 = vsel %vm1210, %v1207, %v1199
        %v1218 = vsel %vm1210, %v1209, %v1201
        %s1219 = scalar_lea.vmem %s5, 7
        %v1220 = vld [vmem:[%s1219] ss:$8 sm:$0x3]
        %v1222 = vperm.slane %v1220, 0
        %v1223 = vperm.slane %v1220, 1
        %v1226 = vmul.f32 %v1211, %v1222
        %v1227 = vmul.f32 %v1215, %v1223
        %v1228 = vmul.f32 %v1212, %v1222
        %v1229 = vmul.f32 %v1216, %v1223
        %v1230 = vmul.f32 %v1213, %v1222
        %v1231 = vmul.f32 %v1217, %v1223
        %v1232 = vmul.f32 %v1214, %v1222
        %v1233 = vmul.f32 %v1218, %v1223
        %1234 = vrot.lane.b32.xlu0 %v945, 111
        %v1235 = vpop.permute.xlu0 %1234
        %1236 = vrot.lane.b32.xlu0 %v947, 111
        %v1237 = vpop.permute.xlu0 %1236
        %1238 = vrot.lane.b32.xlu0 %v949, 111
        %v1239 = vpop.permute.xlu0 %1238
        %1240 = vrot.lane.b32.xlu0 %v951, 111
        %v1241 = vpop.permute.xlu0 %1240
        %1242 = vrot.lane.b32.xlu0 %v946, 111
        %v1243 = vpop.permute.xlu0 %1242
        %1244 = vrot.lane.b32.xlu0 %v948, 111
        %v1245 = vpop.permute.xlu0 %1244
        %1246 = vrot.lane.b32.xlu0 %v950, 111
        %v1247 = vpop.permute.xlu0 %1246
        %1248 = vrot.lane.b32.xlu0 %v952, 111
        %v1249 = vpop.permute.xlu0 %1248
        %vm1250 = vcmp.lt.s32.totalorder %v970, 111
        %v1251 = vsel %vm1250, %v1235, %v1243
        %v1252 = vsel %vm1250, %v1237, %v1245
        %v1253 = vsel %vm1250, %v1239, %v1247
        %v1254 = vsel %vm1250, %v1241, %v1249
        %v1255 = vsel %vm1250, %v1243, %v1235
        %v1256 = vsel %vm1250, %v1245, %v1237
        %v1257 = vsel %vm1250, %v1247, %v1239
        %v1258 = vsel %vm1250, %v1249, %v1241
        %s1259 = scalar_lea.vmem %s5, 16
        %v1260 = vld [vmem:[%s1259] ss:$8 sm:$0x3]
        %v1262 = vperm.slane %v1260, 0
        %v1263 = vperm.slane %v1260, 1
        %v1266 = vmul.f32 %v1251, %v1262
        %v1267 = vmul.f32 %v1255, %v1263
        %v1268 = vmul.f32 %v1252, %v1262
        %v1269 = vmul.f32 %v1256, %v1263
        %v1270 = vmul.f32 %v1253, %v1262
        %v1271 = vmul.f32 %v1257, %v1263
        %v1272 = vmul.f32 %v1254, %v1262
        %v1273 = vmul.f32 %v1258, %v1263
        %v1274 = vld [vmem:[%s9] sm:$0xff]
        %v1275 = vld [vmem:[%s9 + $0x8] sm:$0xff]
        %v1276 = vld [vmem:[%s9 + $0x10] sm:$0xff]
        %v1277 = vld [vmem:[%s9 + $0x18] sm:$0xff]
        %v1278 = vld [vmem:[%s9 + $0x20] sm:$0xff]
        %v1279 = vld [vmem:[%s9 + $0x28] sm:$0xff]
        %v1280 = vld [vmem:[%s9 + $0x30] sm:$0xff]
        %v1281 = vld [vmem:[%s9 + $0x38] sm:$0xff]
        %v1282 = vld [vmem:[%s9 + $0x40] sm:$0xff]
        %v1283 = vld [vmem:[%s9 + $0x48] sm:$0xff]
        %v1284 = vld [vmem:[%s9 + $0x50] sm:$0xff]
        %v1285 = vld [vmem:[%s9 + $0x58] sm:$0xff]
        %v1286 = vld [vmem:[%s10] sm:$0xff]
        %v1287 = vld [vmem:[%s10 + $0x8] sm:$0xff]
        %v1288 = vld [vmem:[%s10 + $0x10] sm:$0xff]
        %v1289 = vld [vmem:[%s10 + $0x18] sm:$0xff]
        %1291 = vset.pattern.permute.xlu0 0
        %1292 = vperm.xlu0 %1291, %v1286
        %v1293 = vpop.permute.xlu0 %1292
        %1296 = vset.pattern.permute.xlu0 0
        %1297 = vperm.xlu0 %1296, %v1287
        %v1298 = vpop.permute.xlu0 %1297
        %1301 = vset.pattern.permute.xlu0 0
        %1302 = vperm.xlu0 %1301, %v1288
        %v1303 = vpop.permute.xlu0 %1302
        %1306 = vset.pattern.permute.xlu0 0
        %1307 = vperm.xlu0 %1306, %v1289
        %v1308 = vpop.permute.xlu0 %1307
        %vm1310 = vcmask 261120
        %v1312 = vsel %vm1310, %v1276, 0
        %v1315 = vsel %vm1310, %v1279, 0
        %v1318 = vsel %vm1310, %v1282, 0
        %v1321 = vsel %vm1310, %v1285, 0
        %1323 = vmatpush.msra.mxu0 %v1112
        %1324 = vmatpush.msra.mxu0 %v1110
        %1325 = vmatpush.msra.mxu0 %v1108
        %1326 = vmatpush.msra.mxu0 %v1106
        %1327 = vmatpush.msra.mxu0 %v1072
        %1328 = vmatpush.msra.mxu0 %v1070
        %1329 = vmatpush.msra.mxu0 %v1068
        %1330 = vmatpush.msra.mxu0 %v1066
        %1331 = vmatpush.msra.mxu0 %v1032
        %1332 = vmatpush.msra.mxu0 %v1030
        %1333 = vmatpush.msra.mxu0 %v1028
        %1334 = vmatpush.msra.mxu0 %v1026
        %1335 = vmatpush.msra.mxu0 %v992
        %1336 = vmatpush.msra.mxu0 %v990
        %1337 = vmatpush.msra.mxu0 %v988
        %1338 = vmatpush.msra.mxu0 %v986
        %1339 = vmatmul.f32.gmra.mxu0 %v1274
        %v1340 = vpop.f32.mrf.mxu0
        %v1341 = vadd.f32 %v1293, %v1340
        %1342 = vmatmul.f32.gmra.mxu0 %v1277
        %v1343 = vpop.f32.mrf.mxu0
        %v1344 = vadd.f32 %v1298, %v1343
        %1345 = vmatmul.f32.gmra.mxu0 %v1280
        %v1346 = vpop.f32.mrf.mxu0
        %v1347 = vadd.f32 %v1303, %v1346
        %1348 = vmatmul.f32.gmra.mxu0 %v1283
        %v1349 = vpop.f32.mrf.mxu0
        %v1350 = vadd.f32 %v1308, %v1349
        %1351 = vdwg.mxu0
        %1352 = vmatpush.msra.mxu0 %v1232
        %1353 = vmatpush.msra.mxu0 %v1230
        %1354 = vmatpush.msra.mxu0 %v1228
        %1355 = vmatpush.msra.mxu0 %v1226
        %1356 = vmatpush.msra.mxu0 %v1192
        %1357 = vmatpush.msra.mxu0 %v1190
        %1358 = vmatpush.msra.mxu0 %v1188
        %1359 = vmatpush.msra.mxu0 %v1186
        %1360 = vmatpush.msra.mxu0 %v1152
        %1361 = vmatpush.msra.mxu0 %v1150
        %1362 = vmatpush.msra.mxu0 %v1148
        %1363 = vmatpush.msra.mxu0 %v1146
        %1364 = vmatpush.msra.mxu0 %v951
        %1365 = vmatpush.msra.mxu0 %v949
        %1366 = vmatpush.msra.mxu0 %v947
        %1367 = vmatpush.msra.mxu0 %v945
        %1368 = vmatmul.f32.gmra.mxu0 %v1275
        %v1369 = vpop.f32.mrf.mxu0
        %v1370 = vadd.f32 %v1341, %v1369
        %1371 = vmatmul.f32.gmra.mxu0 %v1278
        %v1372 = vpop.f32.mrf.mxu0
        %v1373 = vadd.f32 %v1344, %v1372
        %1374 = vmatmul.f32.gmra.mxu0 %v1281
        %v1375 = vpop.f32.mrf.mxu0
        %v1376 = vadd.f32 %v1347, %v1375
        %1377 = vmatmul.f32.gmra.mxu0 %v1284
        %v1378 = vpop.f32.mrf.mxu0
        %v1379 = vadd.f32 %v1350, %v1378
        %1380 = vdwg.mxu0
        %1381 = vmatpush.msra.mxu0 0.0
        %1382 = vmatpush.msra.mxu0 0.0
        %1383 = vmatpush.msra.mxu0 0.0
        %1384 = vmatpush.msra.mxu0 0.0
        %1385 = vmatpush.msra.mxu0 0.0
        %1386 = vmatpush.msra.mxu0 0.0
        %1387 = vmatpush.msra.mxu0 0.0
        %1388 = vmatpush.msra.mxu0 0.0
        %1389 = vmatpush.msra.mxu0 0.0
        %1390 = vmatpush.msra.mxu0 0.0
        %1391 = vmatpush.msra.mxu0 0.0
        %1392 = vmatpush.msra.mxu0 0.0
        %1393 = vmatpush.msra.mxu0 %v1272
        %1394 = vmatpush.msra.mxu0 %v1270
        %1395 = vmatpush.msra.mxu0 %v1268
        %1396 = vmatpush.msra.mxu0 %v1266
        %1397 = vmatmul.f32.gmra.mxu0 %v1312
        %v1398 = vpop.f32.mrf.mxu0
        %v1399 = vadd.f32 %v1370, %v1398
        %1400 = vmatmul.f32.gmra.mxu0 %v1315
        %v1401 = vpop.f32.mrf.mxu0
        %v1402 = vadd.f32 %v1373, %v1401
        %1403 = vmatmul.f32.gmra.mxu0 %v1318
        %v1404 = vpop.f32.mrf.mxu0
        %v1405 = vadd.f32 %v1376, %v1404
        %1406 = vmatmul.f32.gmra.mxu0 %v1321
        %v1407 = vpop.f32.mrf.mxu0
        %v1408 = vadd.f32 %v1379, %v1407
        %1409 = vdwg.mxu0
        %1410 = vmatpush.msra.mxu0 %v1113
        %1411 = vmatpush.msra.mxu0 %v1111
        %1412 = vmatpush.msra.mxu0 %v1109
        %1413 = vmatpush.msra.mxu0 %v1107
        %1414 = vmatpush.msra.mxu0 %v1073
        %1415 = vmatpush.msra.mxu0 %v1071
        %1416 = vmatpush.msra.mxu0 %v1069
        %1417 = vmatpush.msra.mxu0 %v1067
        %1418 = vmatpush.msra.mxu0 %v1033
        %1419 = vmatpush.msra.mxu0 %v1031
        %1420 = vmatpush.msra.mxu0 %v1029
        %1421 = vmatpush.msra.mxu0 %v1027
        %1422 = vmatpush.msra.mxu0 %v993
        %1423 = vmatpush.msra.mxu0 %v991
        %1424 = vmatpush.msra.mxu0 %v989
        %1425 = vmatpush.msra.mxu0 %v987
        %1426 = vmatmul.f32.gmra.mxu0 %v1274
        %v1427 = vpop.f32.mrf.mxu0
        %v1428 = vadd.f32 %v1293, %v1427
        %1429 = vmatmul.f32.gmra.mxu0 %v1277
        %v1430 = vpop.f32.mrf.mxu0
        %v1431 = vadd.f32 %v1298, %v1430
        %1432 = vmatmul.f32.gmra.mxu0 %v1280
        %v1433 = vpop.f32.mrf.mxu0
        %v1434 = vadd.f32 %v1303, %v1433
        %1435 = vmatmul.f32.gmra.mxu0 %v1283
        %v1436 = vpop.f32.mrf.mxu0
        %v1437 = vadd.f32 %v1308, %v1436
        %1438 = vdwg.mxu0
        %1439 = vmatpush.msra.mxu0 %v1233
        %1440 = vmatpush.msra.mxu0 %v1231
        %1441 = vmatpush.msra.mxu0 %v1229
        %1442 = vmatpush.msra.mxu0 %v1227
        %1443 = vmatpush.msra.mxu0 %v1193
        %1444 = vmatpush.msra.mxu0 %v1191
        %1445 = vmatpush.msra.mxu0 %v1189
        %1446 = vmatpush.msra.mxu0 %v1187
        %1447 = vmatpush.msra.mxu0 %v1153
        %1448 = vmatpush.msra.mxu0 %v1151
        %1449 = vmatpush.msra.mxu0 %v1149
        %1450 = vmatpush.msra.mxu0 %v1147
        %1451 = vmatpush.msra.mxu0 %v952
        %1452 = vmatpush.msra.mxu0 %v950
        %1453 = vmatpush.msra.mxu0 %v948
        %1454 = vmatpush.msra.mxu0 %v946
        %1455 = vmatmul.f32.gmra.mxu0 %v1275
        %v1456 = vpop.f32.mrf.mxu0
        %v1457 = vadd.f32 %v1428, %v1456
        %1458 = vmatmul.f32.gmra.mxu0 %v1278
        %v1459 = vpop.f32.mrf.mxu0
        %v1460 = vadd.f32 %v1431, %v1459
        %1461 = vmatmul.f32.gmra.mxu0 %v1281
        %v1462 = vpop.f32.mrf.mxu0
        %v1463 = vadd.f32 %v1434, %v1462
        %1464 = vmatmul.f32.gmra.mxu0 %v1284
        %v1465 = vpop.f32.mrf.mxu0
        %v1466 = vadd.f32 %v1437, %v1465
        %1467 = vdwg.mxu0
        %1468 = vmatpush.msra.mxu0 0.0
        %1469 = vmatpush.msra.mxu0 0.0
        %1470 = vmatpush.msra.mxu0 0.0
        %1471 = vmatpush.msra.mxu0 0.0
        %1472 = vmatpush.msra.mxu0 0.0
        %1473 = vmatpush.msra.mxu0 0.0
        %1474 = vmatpush.msra.mxu0 0.0
        %1475 = vmatpush.msra.mxu0 0.0
        %1476 = vmatpush.msra.mxu0 0.0
        %1477 = vmatpush.msra.mxu0 0.0
        %1478 = vmatpush.msra.mxu0 0.0
        %1479 = vmatpush.msra.mxu0 0.0
        %1480 = vmatpush.msra.mxu0 %v1273
        %1481 = vmatpush.msra.mxu0 %v1271
        %1482 = vmatpush.msra.mxu0 %v1269
        %1483 = vmatpush.msra.mxu0 %v1267
        %1484 = vmatmul.f32.gmra.mxu0 %v1312
        %v1485 = vpop.f32.mrf.mxu0
        %v1486 = vadd.f32 %v1457, %v1485
        %1487 = vmatmul.f32.gmra.mxu0 %v1315
        %v1488 = vpop.f32.mrf.mxu0
        %v1489 = vadd.f32 %v1460, %v1488
        %1490 = vmatmul.f32.gmra.mxu0 %v1318
        %v1491 = vpop.f32.mrf.mxu0
        %v1492 = vadd.f32 %v1463, %v1491
        %1493 = vmatmul.f32.gmra.mxu0 %v1321
        %v1494 = vpop.f32.mrf.mxu0
        %v1495 = vadd.f32 %v1466, %v1494
        %1496 = vdwg.mxu0
        %v1497 = vld [vmem:[%s438] sm:$0x3]
        %1498 = vset.pattern.permute.xlu0 1
        %1499 = vperm.xlu0 %1498, %v641
        %v1500 = vpop.permute.xlu0 %1499
        %1502 = vset.pattern.permute.xlu0 1
        %1503 = vperm.xlu0 %1502, %v642
        %v1504 = vpop.permute.xlu0 %1503
        %1506 = vset.pattern.permute.xlu0 1
        %1507 = vperm.xlu0 %1506, %v643
        %v1508 = vpop.permute.xlu0 %1507
        %1510 = vset.pattern.permute.xlu0 1
        %1511 = vperm.xlu0 %1510, %v644
        %v1512 = vpop.permute.xlu0 %1511
        %v1515 = vperm.slane %v1497, 0
        %v1516 = vperm.slane %v1497, 1
        %v1519 = vmul.f32 %v1500, %v1515
        %v1520 = vmul.f32 %v1500, %v1516
        %v1521 = vmul.f32 %v1504, %v1515
        %v1522 = vmul.f32 %v1504, %v1516
        %v1523 = vmul.f32 %v1508, %v1515
        %v1524 = vmul.f32 %v1508, %v1516
        %v1525 = vmul.f32 %v1512, %v1515
        %v1526 = vmul.f32 %v1512, %v1516
        %v1527 = vadd.f32 %v1399, %v1519
        %v1528 = vadd.f32 %v1486, %v1520
        %v1529 = vadd.f32 %v1402, %v1521
        %v1530 = vadd.f32 %v1489, %v1522
        %v1531 = vadd.f32 %v1405, %v1523
        %v1532 = vadd.f32 %v1492, %v1524
        %v1533 = vadd.f32 %v1408, %v1525
        %v1534 = vadd.f32 %v1495, %v1526
        %vm1535 = vcmp.ge.f32.partialorder %v1527, 0.0
        %vm1536 = vcmp.ge.f32.partialorder %v1528, 0.0
        %vm1537 = vcmp.ge.f32.partialorder %v1529, 0.0
        %vm1538 = vcmp.ge.f32.partialorder %v1530, 0.0
        %vm1539 = vcmp.ge.f32.partialorder %v1531, 0.0
        %vm1540 = vcmp.ge.f32.partialorder %v1532, 0.0
        %vm1541 = vcmp.ge.f32.partialorder %v1533, 0.0
        %vm1542 = vcmp.ge.f32.partialorder %v1534, 0.0
        %v1543 = vmul.f32 %v1527, 0.2
        %v1544 = vmul.f32 %v1528, 0.2
        %v1545 = vmul.f32 %v1529, 0.2
        %v1546 = vmul.f32 %v1530, 0.2
        %v1547 = vmul.f32 %v1531, 0.2
        %v1548 = vmul.f32 %v1532, 0.2
        %v1549 = vmul.f32 %v1533, 0.2
        %v1550 = vmul.f32 %v1534, 0.2
        %v1551 = vsel %vm1535, %v1527, %v1543
        %v1552 = vsel %vm1536, %v1528, %v1544
        %v1553 = vsel %vm1537, %v1529, %v1545
        %v1554 = vsel %vm1538, %v1530, %v1546
        %v1555 = vsel %vm1539, %v1531, %v1547
        %v1556 = vsel %vm1540, %v1532, %v1548
        %v1557 = vsel %vm1541, %v1533, %v1549
        %v1558 = vsel %vm1542, %v1534, %v1550
        %v1559 = vadd.f32 %v1551, %v1552
        %1560 = vadd.xlane.f32.xlu0 %v1559
        %v1561 = vpop.xlane.xlu0 %1560
        %v1562 = vadd.f32 %v1553, %v1554
        %1563 = vadd.xlane.f32.xlu0 %v1562
        %v1564 = vpop.xlane.xlu0 %1563
        %v1565 = vadd.f32 %v1555, %v1556
        %1566 = vadd.xlane.f32.xlu0 %v1565
        %v1567 = vpop.xlane.xlu0 %1566
        %v1568 = vadd.f32 %v1557, %v1558
        %1569 = vadd.xlane.f32.xlu0 %v1568
        %v1570 = vpop.xlane.xlu0 %1569
        %v1571 = vmul.f32 %v1561, 0.00390625
        %v1572 = vmul.f32 %v1564, 0.00390625
        %v1573 = vmul.f32 %v1567, 0.00390625
        %v1574 = vmul.f32 %v1570, 0.00390625
        %v1575 = vsub.f32 %v1551, %v1571
        %v1576 = vsub.f32 %v1552, %v1571
        %v1577 = vsub.f32 %v1553, %v1572
        %v1578 = vsub.f32 %v1554, %v1572
        %v1579 = vsub.f32 %v1555, %v1573
        %v1580 = vsub.f32 %v1556, %v1573
        %v1581 = vsub.f32 %v1557, %v1574
        %v1582 = vsub.f32 %v1558, %v1574
        %v1583 = vmul.f32 %v1575, %v1575
        %v1584 = vmul.f32 %v1576, %v1576
        %v1585 = vmul.f32 %v1577, %v1577
        %v1586 = vmul.f32 %v1578, %v1578
        %v1587 = vmul.f32 %v1579, %v1579
        %v1588 = vmul.f32 %v1580, %v1580
        %v1589 = vmul.f32 %v1581, %v1581
        %v1590 = vmul.f32 %v1582, %v1582
        %v1591 = vadd.f32 %v1583, %v1584
        %1592 = vadd.xlane.f32.xlu0 %v1591
        %v1593 = vpop.xlane.xlu0 %1592
        %v1594 = vadd.f32 %v1585, %v1586
        %1595 = vadd.xlane.f32.xlu0 %v1594
        %v1596 = vpop.xlane.xlu0 %1595
        %v1597 = vadd.f32 %v1587, %v1588
        %1598 = vadd.xlane.f32.xlu0 %v1597
        %v1599 = vpop.xlane.xlu0 %1598
        %v1600 = vadd.f32 %v1589, %v1590
        %1601 = vadd.xlane.f32.xlu0 %v1600
        %v1602 = vpop.xlane.xlu0 %1601
        %v1603 = vmul.f32 %v1593, 0.00390625
        %v1604 = vmul.f32 %v1596, 0.00390625
        %v1605 = vmul.f32 %v1599, 0.00390625
        %v1606 = vmul.f32 %v1602, 0.00390625
        %v1607 = vadd.f32 %v1603, 1e-08
        %v1608 = vadd.f32 %v1604, 1e-08
        %v1609 = vadd.f32 %v1605, 1e-08
        %v1610 = vadd.f32 %v1606, 1e-08
        %v1611 = vrsqrt.pop %v1607
        %v1612 = vmul.f32 %v1611, %v1607
        %v1613 = vmul.f32 %v1612, %v1611
        %v1614 = vmul.f32 0.5, %v1613
        %v1615 = vsub.f32 1.5, %v1614
        %v1616 = vmul.f32 %v1611, %v1615
        %vm1617 = vweird.f32 %v1607
        %vm1618 = vweird.f32 %v1611
        %vm1619 = vmor %vm1617, %vm1618
        %v1620 = vsel %vm1619, %v1611, %v1616
        %v1621 = vrsqrt.pop %v1608
        %v1622 = vmul.f32 %v1621, %v1608
        %v1623 = vmul.f32 %v1622, %v1621
        %v1624 = vmul.f32 0.5, %v1623
        %v1625 = vsub.f32 1.5, %v1624
        %v1626 = vmul.f32 %v1621, %v1625
        %vm1627 = vweird.f32 %v1608
        %vm1628 = vweird.f32 %v1621
        %vm1629 = vmor %vm1627, %vm1628
        %v1630 = vsel %vm1629, %v1621, %v1626
        %v1631 = vrsqrt.pop %v1609
        %v1632 = vmul.f32 %v1631, %v1609
        %v1633 = vmul.f32 %v1632, %v1631
        %v1634 = vmul.f32 0.5, %v1633
        %v1635 = vsub.f32 1.5, %v1634
        %v1636 = vmul.f32 %v1631, %v1635
        %vm1637 = vweird.f32 %v1609
        %vm1638 = vweird.f32 %v1631
        %vm1639 = vmor %vm1637, %vm1638
        %v1640 = vsel %vm1639, %v1631, %v1636
        %v1641 = vrsqrt.pop %v1610
        %v1642 = vmul.f32 %v1641, %v1610
        %v1643 = vmul.f32 %v1642, %v1641
        %v1644 = vmul.f32 0.5, %v1643
        %v1645 = vsub.f32 1.5, %v1644
        %v1646 = vmul.f32 %v1641, %v1645
        %vm1647 = vweird.f32 %v1610
        %vm1648 = vweird.f32 %v1641
        %vm1649 = vmor %vm1647, %vm1648
        %v1650 = vsel %vm1649, %v1641, %v1646
        %v1651 = vmul.f32 %v1575, %v1620
        %v1652 = vmul.f32 %v1576, %v1620
        %v1653 = vmul.f32 %v1577, %v1630
        %v1654 = vmul.f32 %v1578, %v1630
        %v1655 = vmul.f32 %v1579, %v1640
        %v1656 = vmul.f32 %v1580, %v1640
        %v1657 = vmul.f32 %v1581, %v1650
        %v1658 = vmul.f32 %v1582, %v1650
        %v1659 = vadd.f32 %v633, 1.0
        %v1660 = vadd.f32 %v634, 1.0
        %v1661 = vadd.f32 %v635, 1.0
        %v1662 = vadd.f32 %v636, 1.0
        %1664 = vset.pattern.permute.xlu0 0
        %1665 = vperm.xlu0 %1664, %v1659
        %v1666 = vpop.permute.xlu0 %1665
        %1669 = vset.pattern.permute.xlu0 0
        %1670 = vperm.xlu0 %1669, %v1660
        %v1671 = vpop.permute.xlu0 %1670
        %1674 = vset.pattern.permute.xlu0 0
        %1675 = vperm.xlu0 %1674, %v1661
        %v1676 = vpop.permute.xlu0 %1675
        %1679 = vset.pattern.permute.xlu0 0
        %1680 = vperm.xlu0 %1679, %v1662
        %v1681 = vpop.permute.xlu0 %1680
        %v1683 = vmul.f32 %v1651, %v1666
        %v1684 = vmul.f32 %v1652, %v1666
        %v1685 = vmul.f32 %v1653, %v1671
        %v1686 = vmul.f32 %v1654, %v1671
        %v1687 = vmul.f32 %v1655, %v1676
        %v1688 = vmul.f32 %v1656, %v1676
        %v1689 = vmul.f32 %v1657, %v1681
        %v1690 = vmul.f32 %v1658, %v1681
        %1692 = vset.pattern.permute.xlu0 0
        %1693 = vperm.xlu0 %1692, %v637
        %v1694 = vpop.permute.xlu0 %1693
        %1697 = vset.pattern.permute.xlu0 0
        %1698 = vperm.xlu0 %1697, %v638
        %v1699 = vpop.permute.xlu0 %1698
        %1702 = vset.pattern.permute.xlu0 0
        %1703 = vperm.xlu0 %1702, %v639
        %v1704 = vpop.permute.xlu0 %1703
        %1707 = vset.pattern.permute.xlu0 0
        %1708 = vperm.xlu0 %1707, %v640
        %v1709 = vpop.permute.xlu0 %1708
        %v1711 = vadd.f32 %v1683, %v1694
        %v1712 = vadd.f32 %v1684, %v1694
        %v1713 = vadd.f32 %v1685, %v1699
        %v1714 = vadd.f32 %v1686, %v1699
        %v1715 = vadd.f32 %v1687, %v1704
        %v1716 = vadd.f32 %v1688, %v1704
        %v1717 = vadd.f32 %v1689, %v1709
        %v1718 = vadd.f32 %v1690, %v1709
        %1719 = vst [vmem:[%s420] sm:$0xff] %v1711
        %1720 = vst [vmem:[%s420 + $0x8] sm:$0xff] %v1712
        %1721 = vst [vmem:[%s420 + $0x10] sm:$0xff] %v1713
        %1722 = vst [vmem:[%s420 + $0x18] sm:$0xff] %v1714
        %1723 = vst [vmem:[%s420 + $0x20] sm:$0xff] %v1715
        %1724 = vst [vmem:[%s420 + $0x28] sm:$0xff] %v1716
        %1725 = vst [vmem:[%s420 + $0x30] sm:$0xff] %v1717
        %1726 = vst [vmem:[%s420 + $0x38] sm:$0xff] %v1718
        %s1727 = sand.u32 %s284, 1
        %s1728 = scalar_lea.sflag [#allocation3], %s1727
        %s1729 = sand.u32 %s284, 1
        %s1730 = smul.addr %s1729, 64
        %s1731 = scalar_lea.vmem [#allocation2], %s1730
        // Predicated region
        $region65: #{tpu_custom_call.1} parent=63 // pred_check
          %p1732 = pneg %p294
        $region66: #{tpu_custom_call.1} parent=63 // pred_check_branch
          %1734 = sbr.rel (%p1732) target = $region68
        $region67: #{tpu_custom_call.1} parent=63 // pred_region
          %1736 = vsyncadd %s1728, 0
          %s1737 = smul.addr %s25, 8
          %s1738 = smul.addr %s1737, 8
          %s1739 = scalar_lea.hbm %s11, %s1738
          %s1740 = sshll.u32 %s1731, 4
          %s1741 = int_to_ptr.vmem [resolvable:$true] %s1740
          %s1742 = sshll.u32 %s1739, 4
          %s1743 = int_to_ptr.hbm [resolvable:$true] %s1742
          %1748 = dma.vmem_to_hbm [thread:$0]  %s1741, 1024, %s1743, %s1728, 256, 256, 16
        $region68: #{tpu_custom_call.1} parent=63 // pred_fallthru
          _
      $region64: #{tpu_custom_call.1} parent=5 // pred_fallthru
        _
      %p1749 = scmp.le.s32.totalorder 2, %s20
      // Predicated region
      $region69: #{tpu_custom_call.1} parent=5 // pred_check
        %p1750 = pneg %p1749
      $region70: #{tpu_custom_call.1} parent=5 // pred_check_branch
        %1752 = sbr.rel (%p1750) target = $region72
      $region71: #{tpu_custom_call.1} parent=5 // pred_region
        %s1753 = ssub.s32 %s20, 2
        // Predicated region
        $region73: #{tpu_custom_call.1} parent=71 // pred_check
          %p1754 = pneg %p300
        $region74: #{tpu_custom_call.1} parent=71 // pred_check_branch
          %1756 = sbr.rel (%p1754) target = $region76
        $region75: #{tpu_custom_call.1} parent=71 // pred_region
          %s1757 = sand.u32 %s285, 1
          %s1758 = scalar_lea.sflag [#allocation3], %s1757
          %s1759 = sand.u32 %s285, 1
          %s1760 = smul.addr %s1759, 64
          %s1761 = scalar_lea.vmem [#allocation2], %s1760
          %1763 = dma.done %s1758, 1024
        $region76: #{tpu_custom_call.1} parent=71 // pred_fallthru
          _
      $region72: #{tpu_custom_call.1} parent=5 // pred_fallthru
        _
    $region6: #{tpu_custom_call.1} parent=1 // loop_footer
      %s24 = sadd.s32 1, %s20
    $region7: #{tpu_custom_call.1} parent=1 // loop_footer_branch
      %19 = sbr.rel target = $region3
    $region8: #{tpu_custom_call.1} parent=1 // loop_exit
      _
    %1764 = vsyncpa [#allocation3], 1
    %s1765 = scalar_lea.sflag [#allocation3], 1
    %1766 = vsyncpa %s1765, 1

</llo_original>
